<compile_context>
chip_gen: v7x
topology: tpu7x:2x2x1
jax: 0.10.0
libtpu: 0.0.40
codegen_flags: <defaults>
</compile_context>

<pallas_src>
import jax
import jax.numpy as jnp
from jax.experimental import pallas as pl
from jax.experimental.pallas import tpu as pltpu


def fa_layer_kernel(nnz_ref,                      # scalar-prefetch: [gi*gk] i32
                    w_dst_row_ref, w_src_row_ref,  # [1, D], [1, D]
                    b_ref,                         # [1] in SMEM
                    h_dst_ref, h_src_ref,          # [TM, D], [TK, D]
                    d_dst_ref, d_src_ref,          # [TM, 1], [TK, 1]
                    adj_ref,                       # [TM, TK] bf16 (0/1 mask)
                    z_ref,                         # [TM, D] output
                    acc_ref,                       # [TM, D] f32 scratch
                    adst_ref):                     # [TM, 1] f32 scratch
    i = pl.program_id(0)
    k = pl.program_id(1)
    num_k = pl.num_programs(1)

    @pl.when(k == 0)
    def _init():
        acc_ref[...] = jnp.zeros_like(acc_ref)
        # Gate dst-half + bias depends only on the dst-row tile: compute once
        # per i-row (VPU mul + XLU lane-reduce) and reuse for every src tile.
        adst_ref[...] = jnp.sum(h_dst_ref[...] * w_dst_row_ref[...],
                                axis=1, keepdims=True) + b_ref[0]

    # Skip all-zero adjacency tiles entirely (saves the N^2 tanh/EUP work).
    @pl.when(nnz_ref[i * num_k + k] > 0)
    def _compute():
        h_src = h_src_ref[...]                                   # [TK, D]

        # gate([h_dst, h_src]) split into an outer sum of two halves.
        # a_src: lane-dense [1, TK] via dot_general contracting D.
        a_src = jax.lax.dot_general(
            w_src_row_ref[...], h_src,
            dimension_numbers=(((1,), (1,)), ((), ())),
            preferred_element_type=jnp.float32)                  # [1, TK]

        g = jnp.tanh(adst_ref[...] + a_src)                      # [TM, TK]
        e = g * adj_ref[...].astype(jnp.float32)                 # mask (0/1)

        # Degree scaling folded onto the [TK, D] side: hd_u = d_u * h_u.
        hd = h_src * d_src_ref[...]                              # [TK, D]
        acc_ref[...] += jnp.dot(e, hd,
                                preferred_element_type=jnp.float32)

    @pl.when(k == num_k - 1)
    def _finalize():
        # z_v = d_v * sum_u (g * adj)_{vu} * (d_u * h_u)
        z_ref[...] = (d_dst_ref[...] * acc_ref[...]).astype(z_ref.dtype)
    # TODO(synk): nn.Dropout on `e` is identity here (eval mode); training
    # dropout would need a pltpu.prng_random_bits Bernoulli mask on `e`.


def fa_layer(h, gate_w, gate_b, d, adj, *, tm=None, tk=None):
    """h: [N, D] f32, gate_w: [1, 2D], gate_b: [1], d: [N], adj: [N, N] (0/1)."""
    N, D = h.shape
    tm = tm or min(N, 256)
    tk = tk or min(N, 512)
    assert N % tm == 0 and N % tk == 0, "tile sizes must divide N"
    # (8,128) block constraints: either full-dim or aligned.
    assert tm == N or tm % 8 == 0
    assert tk == N or tk % 128 == 0
    gi, gk = N // tm, N // tk

    w_dst_row = gate_w[:, :D].astype(jnp.float32)        # [1, D]
    w_src_row = gate_w[:, D:].astype(jnp.float32)        # [1, D]
    b = gate_b.reshape(1).astype(jnp.float32)            # [1]  (SMEM scalar)
    d_col = d.reshape(N, 1).astype(jnp.float32)          # [N, 1]
    # adj is a 0/1 mask: bf16 is exact and halves the dominant HBM stream.
    # (A *weighted* adjacency would need to stay f32.)
    adj_bf16 = adj.astype(jnp.bfloat16)

    # Per-tile "any edge" table for block-sparse skipping (scalar prefetch).
    nnz = (adj.reshape(gi, tm, gk, tk).sum(axis=(1, 3)) > 0)
    nnz = nnz.astype(jnp.int32).reshape(-1)              # [gi*gk] in SMEM

    grid_spec = pltpu.PrefetchScalarGridSpec(
        num_scalar_prefetch=1,
        grid=(gi, gk),
        in_specs=[
            pl.BlockSpec((1, D), lambda i, k, nnz: (0, 0)),     # w_dst_row
            pl.BlockSpec((1, D), lambda i, k, nnz: (0, 0)),     # w_src_row
            pl.BlockSpec(memory_space=pltpu.MemorySpace.SMEM),  # bias scalar
            pl.BlockSpec((tm, D), lambda i, k, nnz: (i, 0)),    # h (dst rows)
            pl.BlockSpec((tk, D), lambda i, k, nnz: (k, 0)),    # h (src rows)
            pl.BlockSpec((tm, 1), lambda i, k, nnz: (i, 0)),    # d (dst)
            pl.BlockSpec((tk, 1), lambda i, k, nnz: (k, 0)),    # d (src)
            pl.BlockSpec((tm, tk), lambda i, k, nnz: (i, k)),   # adj tile
        ],
        out_specs=pl.BlockSpec((tm, D), lambda i, k, nnz: (i, 0)),
        scratch_shapes=[pltpu.VMEM((tm, D), jnp.float32),   # accumulator
                        pltpu.VMEM((tm, 1), jnp.float32)],  # cached a_dst + b
    )

    return pl.pallas_call(
        fa_layer_kernel,
        out_shape=jax.ShapeDtypeStruct((N, D), jnp.float32),
        grid_spec=grid_spec,
        compiler_params=pltpu.CompilerParams(
            # dst rows are independent (megacore-shardable on v7x),
            # src cols are the reduction axis (last, accumulator-resident).
            dimension_semantics=("parallel", "arbitrary"),
            # Tile budget (2x(tm*tk*2B) adj + h/d tiles + [tm,D] acc) stays
            # well under 32 MiB on every generation, incl. v7x (64 MiB phys).
            vmem_limit_bytes=32 * 1024 * 1024,
        ),
    )(nnz, w_dst_row, w_src_row, b, h, h, d_col, d_col, adj_bf16)


def fa_layer_reference(h, gate_w, gate_b, d, adj):
    N, D = h.shape
    a_dst = h @ gate_w[:, :D].T                        # [N, 1]
    a_src = h @ gate_w[:, D:].T                        # [N, 1]
    gmat = jnp.tanh(a_dst + a_src.T + gate_b.reshape(1, 1))
    e = gmat * d[:, None] * d[None, :] * adj
    return e @ h


if __name__ == "__main__":
    N, D = 256, 16                                     # nodes, in_dim
    TM, TK = 128, 128                                  # 2x2 grid of tiles
    key = jax.random.PRNGKey(0)
    k_h, k_adj, k_w, k_b = jax.random.split(key, 4)

    # Node features.
    h = jax.random.normal(k_h, (N, D), dtype=jnp.float32)

    # Deterministic symmetric adjacency with self-loops (so degrees > 0 and
    # d = deg^-0.5 is finite; a degree-0 node would make d inf).
    rand = jax.random.uniform(k_adj, (N, N)) < 0.15
    adj = jnp.logical_or(rand, rand.T).astype(jnp.float32)
    adj = jnp.maximum(adj, jnp.eye(N, dtype=jnp.float32))
    deg = adj.sum(axis=1)
    d = deg ** -0.5                                    # DGL node data 'd'

    # gate = nn.Linear(2*D, 1) with xavier_normal_(gain=1.414) weight and
    # PyTorch-default uniform bias, initialized deterministically here.
    gain = 1.414
    std = gain * (2.0 / (2 * D + 1)) ** 0.5
    gate_w = std * jax.random.normal(k_w, (1, 2 * D), dtype=jnp.float32)
    bound = 1.0 / (2 * D) ** 0.5
    gate_b = jax.random.uniform(k_b, (1,), minval=-bound, maxval=bound,
                                dtype=jnp.float32)

    z = fa_layer(h, gate_w, gate_b, d, adj, tm=TM, tk=TK)
    z = jax.block_until_ready(z)

    z_ref = fa_layer_reference(h, gate_w, gate_b, d, adj)
    assert z.shape == (N, D)
    assert jnp.allclose(z, z_ref, atol=1e-4, rtol=1e-4), "mismatch vs reference"

    print("KERNEL_OK")
</pallas_src>

<mosaic_0001>
module attributes {stable_mosaic.version = 11 : i64} {
  func.func @fa_layer_kernel(%arg0: i32, %arg1: i32, %arg2: memref<4xi32, #tpu.memory_space<smem>>, %arg3: memref<1x16xf32, #tpu.memory_space<vmem>>, %arg4: memref<1x16xf32, #tpu.memory_space<vmem>>, %arg5: memref<1xf32, #tpu.memory_space<smem>>, %arg6: memref<128x16xf32, #tpu.memory_space<vmem>>, %arg7: memref<128x16xf32, #tpu.memory_space<vmem>>, %arg8: memref<128x1xf32, #tpu.memory_space<vmem>>, %arg9: memref<128x1xf32, #tpu.memory_space<vmem>>, %arg10: memref<128x128xbf16, #tpu.memory_space<vmem>>, %arg11: memref<128x16xf32, #tpu.memory_space<vmem>>, %arg12: memref<128x16xf32, #tpu.memory_space<vmem>>, %arg13: memref<128x1xf32, #tpu.memory_space<vmem>>) attributes {dimension_semantics = [#tpu.dimension_semantics<parallel>, #tpu.dimension_semantics<arbitrary>], iteration_bounds = array<i64: 2, 2>, scalar_prefetch = 1 : i64, scratch_operands = 2 : i64, tpu.core_type = #tpu.core_type<tc>, window_params = [{pipeline_mode = #tpu.pipeline_mode<synchronous>, transform_indices = @transform_0, window_bounds = array<i64: 1, 16>}, {pipeline_mode = #tpu.pipeline_mode<synchronous>, transform_indices = @transform_1, window_bounds = array<i64: 1, 16>}, {transform_indices = @transform_2, window_bounds = array<i64: 1>}, {transform_indices = @transform_3, window_bounds = array<i64: 128, 16>}, {transform_indices = @transform_4, window_bounds = array<i64: 128, 16>}, {transform_indices = @transform_5, window_bounds = array<i64: 128, 1>}, {transform_indices = @transform_6, window_bounds = array<i64: 128, 1>}, {transform_indices = @transform_7, window_bounds = array<i64: 128, 128>}, {transform_indices = @transform_8, window_bounds = array<i64: 128, 16>}]} {
    %c0_i32 = arith.constant 0 : i32
    %0 = arith.cmpi eq, %arg1, %c0_i32 : i32
    %1 = arith.extui %0 : i1 to i32
    %c0_i32_0 = arith.constant 0 : i32
    %2 = arith.cmpi ne, %1, %c0_i32_0 : i32
    scf.if %2 {
      %cst = arith.constant 0.000000e+00 : f32
      %13 = vector.broadcast %cst : f32 to vector<128x16xf32>
      %c0 = arith.constant 0 : index
      %c0_4 = arith.constant 0 : index
      %14 = vector.load %arg12[%c0, %c0_4] : memref<128x16xf32, #tpu.memory_space<vmem>>, vector<128x16xf32>
      tpu.vector_store %arg12[%c0, %c0_4], %13 {strides = array<i32>} : memref<128x16xf32, #tpu.memory_space<vmem>>, vector<128x16xf32>,
      %c0_5 = arith.constant 0 : index
      %c0_6 = arith.constant 0 : index
      %15 = vector.load %arg6[%c0_5, %c0_6] : memref<128x16xf32, #tpu.memory_space<vmem>>, vector<128x16xf32>
      %c0_7 = arith.constant 0 : index
      %c0_8 = arith.constant 0 : index
      %16 = vector.load %arg3[%c0_7, %c0_8] : memref<1x16xf32, #tpu.memory_space<vmem>>, vector<1x16xf32>
      %17 = vector.broadcast %16 : vector<1x16xf32> to vector<128x16xf32>
      %18 = arith.mulf %15, %17 : vector<128x16xf32>
      %cst_9 = arith.constant dense<0.000000e+00> : vector<128xf32>
      %19 = vector.multi_reduction <add>, %18, %cst_9 [1] : vector<128x16xf32> to vector<128xf32>
      %20 = vector.shape_cast %19 : vector<128xf32> to vector<128x1xf32>
      %c0_10 = arith.constant 0 : index
      %21 = memref.load %arg5[%c0_10] : memref<1xf32, #tpu.memory_space<smem>>
      %22 = vector.broadcast %21 : f32 to vector<128x1xf32>
      %23 = arith.addf %20, %22 : vector<128x1xf32>
      %c0_11 = arith.constant 0 : index
      %c0_12 = arith.constant 0 : index
      %24 = vector.load %arg13[%c0_11, %c0_12] : memref<128x1xf32, #tpu.memory_space<vmem>>, vector<128x1xf32>
      tpu.vector_store %arg13[%c0_11, %c0_12], %23 {strides = array<i32>} : memref<128x1xf32, #tpu.memory_space<vmem>>, vector<128x1xf32>,
    } else {
    }
    %c2_i32 = arith.constant 2 : i32
    %3 = arith.muli %arg0, %c2_i32 : i32
    %4 = arith.addi %3, %arg1 : i32
    %5 = arith.index_cast %4 : i32 to index
    %6 = memref.load %arg2[%5] : memref<4xi32, #tpu.memory_space<smem>>
    %c0_i32_1 = arith.constant 0 : i32
    %7 = arith.cmpi sgt, %6, %c0_i32_1 : i32
    %8 = arith.extui %7 : i1 to i32
    %c0_i32_2 = arith.constant 0 : i32
    %9 = arith.cmpi ne, %8, %c0_i32_2 : i32
    scf.if %9 {
      %c0 = arith.constant 0 : index
      %c0_4 = arith.constant 0 : index
      %13 = vector.load %arg7[%c0, %c0_4] : memref<128x16xf32, #tpu.memory_space<vmem>>, vector<128x16xf32>
      %c0_5 = arith.constant 0 : index
      %c0_6 = arith.constant 0 : index
      %14 = vector.load %arg4[%c0_5, %c0_6] : memref<1x16xf32, #tpu.memory_space<vmem>>, vector<1x16xf32>
      %cst = arith.constant dense<0.000000e+00> : vector<1x128xf32>
      %15 = tpu.matmul %14, %13, %cst {dimension_numbers = #tpu.dot_dimension_numbers<[1], [1], [0], [0], [0, 0, 1, 0], [], []>} : vector<1x16xf32>, vector<128x16xf32>, vector<1x128xf32> -> vector<1x128xf32>
      %c0_7 = arith.constant 0 : index
      %c0_8 = arith.constant 0 : index
      %16 = vector.load %arg13[%c0_7, %c0_8] : memref<128x1xf32, #tpu.memory_space<vmem>>, vector<128x1xf32>
      %17 = vector.broadcast %16 : vector<128x1xf32> to vector<128x128xf32>
      %18 = vector.broadcast %15 : vector<1x128xf32> to vector<128x128xf32>
      %19 = arith.addf %17, %18 : vector<128x128xf32>
      %20 = math.tanh %19 : vector<128x128xf32>
      %c0_9 = arith.constant 0 : index
      %c0_10 = arith.constant 0 : index
      %21 = vector.load %arg10[%c0_9, %c0_10] : memref<128x128xbf16, #tpu.memory_space<vmem>>, vector<128x128xbf16>
      %22 = arith.extf %21 : vector<128x128xbf16> to vector<128x128xf32>
      %23 = arith.mulf %20, %22 : vector<128x128xf32>
      %c0_11 = arith.constant 0 : index
      %c0_12 = arith.constant 0 : index
      %24 = vector.load %arg9[%c0_11, %c0_12] : memref<128x1xf32, #tpu.memory_space<vmem>>, vector<128x1xf32>
      %25 = vector.broadcast %24 : vector<128x1xf32> to vector<128x16xf32>
      %26 = arith.mulf %13, %25 : vector<128x16xf32>
      %c0_13 = arith.constant 0 : index
      %c0_14 = arith.constant 0 : index
      %27 = vector.load %arg12[%c0_13, %c0_14] : memref<128x16xf32, #tpu.memory_space<vmem>>, vector<128x16xf32>
      %cst_15 = arith.constant dense<0.000000e+00> : vector<128x16xf32>
      %28 = tpu.matmul %23, %26, %cst_15 {dimension_numbers = #tpu.dot_dimension_numbers<[1], [0], [0], [1], [0, 0, 1, 1], [], []>} : vector<128x128xf32>, vector<128x16xf32>, vector<128x16xf32> -> vector<128x16xf32>
      %29 = arith.addf %27, %28 : vector<128x16xf32>
      %c0_16 = arith.constant 0 : index
      %c0_17 = arith.constant 0 : index
      %30 = vector.load %arg12[%c0_16, %c0_17] : memref<128x16xf32, #tpu.memory_space<vmem>>, vector<128x16xf32>
      tpu.vector_store %arg12[%c0_16, %c0_17], %29 {strides = array<i32>} : memref<128x16xf32, #tpu.memory_space<vmem>>, vector<128x16xf32>,
    } else {
    }
    %c1_i32 = arith.constant 1 : i32
    %10 = arith.cmpi eq, %arg1, %c1_i32 : i32
    %11 = arith.extui %10 : i1 to i32
    %c0_i32_3 = arith.constant 0 : i32
    %12 = arith.cmpi ne, %11, %c0_i32_3 : i32
    scf.if %12 {
      %c0 = arith.constant 0 : index
      %c0_4 = arith.constant 0 : index
      %13 = vector.load %arg8[%c0, %c0_4] : memref<128x1xf32, #tpu.memory_space<vmem>>, vector<128x1xf32>
      %c0_5 = arith.constant 0 : index
      %c0_6 = arith.constant 0 : index
      %14 = vector.load %arg12[%c0_5, %c0_6] : memref<128x16xf32, #tpu.memory_space<vmem>>, vector<128x16xf32>
      %15 = vector.broadcast %13 : vector<128x1xf32> to vector<128x16xf32>
      %16 = arith.mulf %15, %14 : vector<128x16xf32>
      %c0_7 = arith.constant 0 : index
      %c0_8 = arith.constant 0 : index
      %17 = vector.load %arg11[%c0_7, %c0_8] : memref<128x16xf32, #tpu.memory_space<vmem>>, vector<128x16xf32>
      tpu.vector_store %arg11[%c0_7, %c0_8], %16 {strides = array<i32>} : memref<128x16xf32, #tpu.memory_space<vmem>>, vector<128x16xf32>,
    } else {
    }
    return
  }
  func.func @transform_0(%arg0: i32, %arg1: i32, %arg2: memref<4xi32, #tpu.memory_space<smem>>) -> (i32, i32) {
    %c0_i32 = arith.constant 0 : i32
    %c0_i32_0 = arith.constant 0 : i32
    %c0_i32_1 = arith.constant 0 : i32
    return %c0_i32, %c0_i32_0 : i32, i32
  }
  func.func @transform_1(%arg0: i32, %arg1: i32, %arg2: memref<4xi32, #tpu.memory_space<smem>>) -> (i32, i32) {
    %c0_i32 = arith.constant 0 : i32
    %c0_i32_0 = arith.constant 0 : i32
    %c0_i32_1 = arith.constant 0 : i32
    return %c0_i32, %c0_i32_0 : i32, i32
  }
  func.func @transform_2(%arg0: i32, %arg1: i32, %arg2: memref<4xi32, #tpu.memory_space<smem>>) -> i32 {
    %c0_i32 = arith.constant 0 : i32
    %c0_i32_0 = arith.constant 0 : i32
    return %c0_i32 : i32
  }
  func.func @transform_3(%arg0: i32, %arg1: i32, %arg2: memref<4xi32, #tpu.memory_space<smem>>) -> (i32, i32) {
    %c0_i32 = arith.constant 0 : i32
    %c0_i32_0 = arith.constant 0 : i32
    return %arg0, %c0_i32 : i32, i32
  }
  func.func @transform_4(%arg0: i32, %arg1: i32, %arg2: memref<4xi32, #tpu.memory_space<smem>>) -> (i32, i32) {
    %c0_i32 = arith.constant 0 : i32
    %c0_i32_0 = arith.constant 0 : i32
    return %arg1, %c0_i32 : i32, i32
  }
  func.func @transform_5(%arg0: i32, %arg1: i32, %arg2: memref<4xi32, #tpu.memory_space<smem>>) -> (i32, i32) {
    %c0_i32 = arith.constant 0 : i32
    %c0_i32_0 = arith.constant 0 : i32
    return %arg0, %c0_i32 : i32, i32
  }
  func.func @transform_6(%arg0: i32, %arg1: i32, %arg2: memref<4xi32, #tpu.memory_space<smem>>) -> (i32, i32) {
    %c0_i32 = arith.constant 0 : i32
    %c0_i32_0 = arith.constant 0 : i32
    return %arg1, %c0_i32 : i32, i32
  }
  func.func @transform_7(%arg0: i32, %arg1: i32, %arg2: memref<4xi32, #tpu.memory_space<smem>>) -> (i32, i32) {
    %c0_i32 = arith.constant 0 : i32
    return %arg0, %arg1 : i32, i32
  }
  func.func @transform_8(%arg0: i32, %arg1: i32, %arg2: memref<4xi32, #tpu.memory_space<smem>>) -> (i32, i32) {
    %c0_i32 = arith.constant 0 : i32
    %c0_i32_0 = arith.constant 0 : i32
    return %arg0, %c0_i32 : i32, i32
  }
}

</mosaic_0001>

<llo_original>
// kernel: tpu_custom_call.1
$region0: #{tpu_custom_call.1}
  #allocation0 [shape = 'u32[]', space=smem, size = 0x4, offset = 0x4, fixed_abs, tag = 'smem constant byte address 0x4 - core index']
  #allocation1 [shape = 'u32[144,128]{1,0:T(1,128)}', space=vmem, size = 0x12000, scoped, tag = 'internal scratch']
  #allocation2 [shape = 'f32[128,16]{1,0:T(8,128)}', space=vmem, size = 0x10000, scoped, tag = 'scratch operand']
  #allocation3 [shape = 'f32[128,1]{1,0:T(8,128)}', space=vmem, size = 0x10000, scoped, tag = 'scratch operand']
  #allocation4 [shape = 's32[1]{0}', space=sflag, size = 0x4, scoped, tag = 'scoped memory for tpu_custom_call.1']
  #allocation5 [shape = 'u8[512]{0}', space=smem, size = 0x200, scoped, tag = 'prefetched SMEM operand 0']
  #allocation6 [shape = 'f32[1]{0:T(128)S(6)}', space=smem, size = 0x200, scoped, tag = 'scoped memory for tpu_custom_call.1']
  %s0 = inlined_call_operand.vmem [shape: s32[4], index: 0, kind: input, shape index: {}]
  %s1 = inlined_call_operand.vmem [shape: f32[1,16], index: 1, kind: input, shape index: {}]
  %s2 = inlined_call_operand.vmem [shape: f32[1,16], index: 2, kind: input, shape index: {}]
  %s3 = inlined_call_operand.<no memory space> [shape: f32[1], index: 3, kind: input, shape index: {}]
  %s4 = inlined_call_operand.vmem [shape: f32[256,16], index: 4, kind: input, shape index: {}]
  %s5 = inlined_call_operand.vmem [shape: f32[256,16], index: 5, kind: input, shape index: {}]
  %s6 = inlined_call_operand.vmem [shape: f32[256,1], index: 6, kind: input, shape index: {}]
  %s7 = inlined_call_operand.vmem [shape: f32[256,1], index: 7, kind: input, shape index: {}]
  %s8 = inlined_call_operand.vmem [shape: bf16[256,256], index: 8, kind: input, shape index: {}]
  %s9 = inlined_call_operand.vmem [shape: f32[256,16], index: 9, kind: output, shape index: {}]
  %s10 = sld [smem:[#allocation0]]
  $region118: #{tpu_custom_call.1} parent=0
    _
  %s12 = ssub.s32 1, %s10
  %s13 = scalar_select 0, %s12, %s10
  %s14 = sshll.u32 %s0, 4
  %s15 = int_to_ptr.vmem [resolvable:$true] %s14
  %17 = dma.vmem_to_smem %s15, 16, [#allocation5], [#allocation4]
  %18 = sst [smem:[#allocation6]] %s3
  %19 = dma.done [#allocation4], 16
  %20 = sfence
  $region1: #{tpu_custom_call.1} parent=0
    #allocation7 [shape = 'u8[65536]{0}', space=vmem, size = 0x10000, scoped, tag = 'input window, operand 8']
    loop: start=0, step=1, limit=6
    $region2: #{tpu_custom_call.1} parent=1 // loop_pre_header
      _
    $region3: #{tpu_custom_call.1} parent=1 // loop_header
      %s22 = sphi 0, %s26
      %p23 = scmp.ge.s32.totalorder %s22, 6
      %s29 = sphi 0, %s41
      %s30 = sphi 0, %s37
      %s31 = sphi 0, %s29
      %s32 = sphi 0, %s30
      %s33 = sphi 0, %s31
      %s34 = sphi 0, %s32
      %s42 = sphi 0, %s42
      %s44 = sphi 0, %s42
      %s45 = sphi 0, %s44
      %s59 = sphi 0, %s45
      %s63 = sphi 0, %s63
      %s65 = sphi 0, %s63
      %s66 = sphi 0, %s65
      %s80 = sphi 0, %s66
      %s84 = sphi 0, %s84
      %s86 = sphi 0, %s84
      %s87 = sphi 0, %s86
      %s101 = sphi 0, %s87
      %s107 = sphi 0, %s109
      %s110 = sphi 0, %s107
      %s111 = sphi 0, %s110
      %s127 = sphi 0, %s111
      %s133 = sphi 0, %s135
      %s136 = sphi 0, %s133
      %s137 = sphi 0, %s136
      %s153 = sphi 0, %s137
      %s159 = sphi 0, %s161
      %s162 = sphi 0, %s159
      %s163 = sphi 0, %s162
      %s179 = sphi 0, %s163
      %s185 = sphi 0, %s187
      %s188 = sphi 0, %s185
      %s189 = sphi 0, %s188
      %s205 = sphi 0, %s189
      %s213 = sphi 0, %s215
      %s216 = sphi 0, %s213
      %s217 = sphi 0, %s216
      %s233 = sphi 0, %s217
      %s239 = sphi 0, %s241
      %s242 = sphi 0, %s239
      %s243 = sphi 0, %s242
      %s259 = sphi 0, %s243
    $region4: #{tpu_custom_call.1} parent=1 // loop_header_branch
      %25 = sbr.rel (%p23) target = $region8
    $region5: #{tpu_custom_call.1} parent=1 // loop_body
      %s27 = ssub.s32 %s22, 1
      %s28 = ssub.s32 %s22, 2
      %s35 = sadd.s32 1, %s30
      %p36 = scmp.ge.s32.totalorder %s35, 2
      %s37 = scalar_select %p36, 0, %s35
      %s38 = sadd.s32 1, %s29
      %s39 = scalar_select %p36, %s38, %s29
      %p40 = scmp.ge.s32.totalorder %s39, 2
      %s41 = scalar_select %p40, 0, %s39
      %s43 = sadd.s32 %s42, 1
      %p46 = scmp.eq.s32.totalorder %s22, 3
      %p47 = scmp.ne.s32.totalorder %s42, %s44
      %p48 = scmp.eq.s32.totalorder %s22, 0
      %p49 = por %p47, %p48
      %p50 = scmp.ne.s32.totalorder %s42, %s44
      %p51 = scmp.eq.s32.totalorder %s27, 3
      %p52 = por %p50, %p51
      %p53 = scmp.ne.s32.totalorder %s44, %s45
      %p54 = scmp.eq.s32.totalorder %s27, 0
      %p55 = por %p53, %p54
      %p56 = scmp.ne.s32.totalorder %s44, %s45
      %p57 = scmp.eq.s32.totalorder %s28, 3
      %p58 = por %p56, %p57
      %p60 = scmp.ne.s32.totalorder %s45, %s59
      %p61 = scmp.eq.s32.totalorder %s28, 0
      %p62 = por %p60, %p61
      %s64 = sadd.s32 %s63, 1
      %p67 = scmp.eq.s32.totalorder %s22, 3
      %p68 = scmp.ne.s32.totalorder %s63, %s65
      %p69 = scmp.eq.s32.totalorder %s22, 0
      %p70 = por %p68, %p69
      %p71 = scmp.ne.s32.totalorder %s63, %s65
      %p72 = scmp.eq.s32.totalorder %s27, 3
      %p73 = por %p71, %p72
      %p74 = scmp.ne.s32.totalorder %s65, %s66
      %p75 = scmp.eq.s32.totalorder %s27, 0
      %p76 = por %p74, %p75
      %p77 = scmp.ne.s32.totalorder %s65, %s66
      %p78 = scmp.eq.s32.totalorder %s28, 3
      %p79 = por %p77, %p78
      %p81 = scmp.ne.s32.totalorder %s66, %s80
      %p82 = scmp.eq.s32.totalorder %s28, 0
      %p83 = por %p81, %p82
      %s85 = sadd.s32 %s84, 1
      %p88 = scmp.eq.s32.totalorder %s22, 3
      %p89 = scmp.ne.s32.totalorder %s84, %s86
      %p90 = scmp.eq.s32.totalorder %s22, 0
      %p91 = por %p89, %p90
      %p92 = scmp.ne.s32.totalorder %s84, %s86
      %p93 = scmp.eq.s32.totalorder %s27, 3
      %p94 = por %p92, %p93
      %p95 = scmp.ne.s32.totalorder %s86, %s87
      %p96 = scmp.eq.s32.totalorder %s27, 0
      %p97 = por %p95, %p96
      %p98 = scmp.ne.s32.totalorder %s86, %s87
      %p99 = scmp.eq.s32.totalorder %s28, 3
      %p100 = por %p98, %p99
      %p102 = scmp.ne.s32.totalorder %s87, %s101
      %p103 = scmp.eq.s32.totalorder %s28, 0
      %p104 = por %p102, %p103
      %s105 = ssub.s32 %s29, %s41
      %p106 = scmp.eq.s32.totalorder %s105, 0
      %s108 = sadd.s32 %s107, 1
      %s109 = scalar_select %p106, %s107, %s108
      %p112 = pneg %p106
      %p113 = scmp.eq.s32.totalorder %s22, 3
      %p114 = por %p112, %p113
      %p115 = scmp.ne.s32.totalorder %s107, %s110
      %p116 = scmp.eq.s32.totalorder %s22, 0
      %p117 = por %p115, %p116
      %p118 = scmp.ne.s32.totalorder %s107, %s110
      %p119 = scmp.eq.s32.totalorder %s27, 3
      %p120 = por %p118, %p119
      %p121 = scmp.ne.s32.totalorder %s110, %s111
      %p122 = scmp.eq.s32.totalorder %s27, 0
      %p123 = por %p121, %p122
      %p124 = scmp.ne.s32.totalorder %s110, %s111
      %p125 = scmp.eq.s32.totalorder %s28, 3
      %p126 = por %p124, %p125
      %p128 = scmp.ne.s32.totalorder %s111, %s127
      %p129 = scmp.eq.s32.totalorder %s28, 0
      %p130 = por %p128, %p129
      %s131 = ssub.s32 %s30, %s37
      %p132 = scmp.eq.s32.totalorder %s131, 0
      %s134 = sadd.s32 %s133, 1
      %s135 = scalar_select %p132, %s133, %s134
      %p138 = pneg %p132
      %p139 = scmp.eq.s32.totalorder %s22, 3
      %p140 = por %p138, %p139
      %p141 = scmp.ne.s32.totalorder %s133, %s136
      %p142 = scmp.eq.s32.totalorder %s22, 0
      %p143 = por %p141, %p142
      %p144 = scmp.ne.s32.totalorder %s133, %s136
      %p145 = scmp.eq.s32.totalorder %s27, 3
      %p146 = por %p144, %p145
      %p147 = scmp.ne.s32.totalorder %s136, %s137
      %p148 = scmp.eq.s32.totalorder %s27, 0
      %p149 = por %p147, %p148
      %p150 = scmp.ne.s32.totalorder %s136, %s137
      %p151 = scmp.eq.s32.totalorder %s28, 3
      %p152 = por %p150, %p151
      %p154 = scmp.ne.s32.totalorder %s137, %s153
      %p155 = scmp.eq.s32.totalorder %s28, 0
      %p156 = por %p154, %p155
      %s157 = ssub.s32 %s29, %s41
      %p158 = scmp.eq.s32.totalorder %s157, 0
      %s160 = sadd.s32 %s159, 1
      %s161 = scalar_select %p158, %s159, %s160
      %p164 = pneg %p158
      %p165 = scmp.eq.s32.totalorder %s22, 3
      %p166 = por %p164, %p165
      %p167 = scmp.ne.s32.totalorder %s159, %s162
      %p168 = scmp.eq.s32.totalorder %s22, 0
      %p169 = por %p167, %p168
      %p170 = scmp.ne.s32.totalorder %s159, %s162
      %p171 = scmp.eq.s32.totalorder %s27, 3
      %p172 = por %p170, %p171
      %p173 = scmp.ne.s32.totalorder %s162, %s163
      %p174 = scmp.eq.s32.totalorder %s27, 0
      %p175 = por %p173, %p174
      %p176 = scmp.ne.s32.totalorder %s162, %s163
      %p177 = scmp.eq.s32.totalorder %s28, 3
      %p178 = por %p176, %p177
      %p180 = scmp.ne.s32.totalorder %s163, %s179
      %p181 = scmp.eq.s32.totalorder %s28, 0
      %p182 = por %p180, %p181
      %s183 = ssub.s32 %s30, %s37
      %p184 = scmp.eq.s32.totalorder %s183, 0
      %s186 = sadd.s32 %s185, 1
      %s187 = scalar_select %p184, %s185, %s186
      %p190 = pneg %p184
      %p191 = scmp.eq.s32.totalorder %s22, 3
      %p192 = por %p190, %p191
      %p193 = scmp.ne.s32.totalorder %s185, %s188
      %p194 = scmp.eq.s32.totalorder %s22, 0
      %p195 = por %p193, %p194
      %p196 = scmp.ne.s32.totalorder %s185, %s188
      %p197 = scmp.eq.s32.totalorder %s27, 3
      %p198 = por %p196, %p197
      %p199 = scmp.ne.s32.totalorder %s188, %s189
      %p200 = scmp.eq.s32.totalorder %s27, 0
      %p201 = por %p199, %p200
      %p202 = scmp.ne.s32.totalorder %s188, %s189
      %p203 = scmp.eq.s32.totalorder %s28, 3
      %p204 = por %p202, %p203
      %p206 = scmp.ne.s32.totalorder %s189, %s205
      %p207 = scmp.eq.s32.totalorder %s28, 0
      %p208 = por %p206, %p207
      %s209 = ssub.s32 %s29, %s41
      %s210 = ssub.s32 %s30, %s37
      %s211 = sor.u32 %s209, %s210
      %p212 = scmp.eq.s32.totalorder %s211, 0
      %s214 = sadd.s32 %s213, 1
      %s215 = scalar_select %p212, %s213, %s214
      %p218 = pneg %p212
      %p219 = scmp.eq.s32.totalorder %s22, 3
      %p220 = por %p218, %p219
      %p221 = scmp.ne.s32.totalorder %s213, %s216
      %p222 = scmp.eq.s32.totalorder %s22, 0
      %p223 = por %p221, %p222
      %p224 = scmp.ne.s32.totalorder %s213, %s216
      %p225 = scmp.eq.s32.totalorder %s27, 3
      %p226 = por %p224, %p225
      %p227 = scmp.ne.s32.totalorder %s216, %s217
      %p228 = scmp.eq.s32.totalorder %s27, 0
      %p229 = por %p227, %p228
      %p230 = scmp.ne.s32.totalorder %s216, %s217
      %p231 = scmp.eq.s32.totalorder %s28, 3
      %p232 = por %p230, %p231
      %p234 = scmp.ne.s32.totalorder %s217, %s233
      %p235 = scmp.eq.s32.totalorder %s28, 0
      %p236 = por %p234, %p235
      %s237 = ssub.s32 %s29, %s41
      %p238 = scmp.eq.s32.totalorder %s237, 0
      %s240 = sadd.s32 %s239, 1
      %s241 = scalar_select %p238, %s239, %s240
      %p244 = pneg %p238
      %p245 = scmp.eq.s32.totalorder %s22, 3
      %p246 = por %p244, %p245
      %p247 = scmp.ne.s32.totalorder %s239, %s242
      %p248 = scmp.eq.s32.totalorder %s22, 0
      %p249 = por %p247, %p248
      %p250 = scmp.ne.s32.totalorder %s239, %s242
      %p251 = scmp.eq.s32.totalorder %s27, 3
      %p252 = por %p250, %p251
      %p253 = scmp.ne.s32.totalorder %s242, %s243
      %p254 = scmp.eq.s32.totalorder %s27, 0
      %p255 = por %p253, %p254
      %p256 = scmp.ne.s32.totalorder %s242, %s243
      %p257 = scmp.eq.s32.totalorder %s28, 3
      %p258 = por %p256, %p257
      %p260 = scmp.ne.s32.totalorder %s243, %s259
      %p261 = scmp.eq.s32.totalorder %s28, 0
      %p262 = por %p260, %p261
      %p263 = scmp.le.s32.totalorder 1, %s22
      %p264 = scmp.lt.s32.totalorder %s22, 5
      %p265 = pnand %p263, %p264
      %p266 = pneg %p265
      // Predicated region
      $region9: #{tpu_custom_call.1} parent=5 // pred_check
        _
      $region10: #{tpu_custom_call.1} parent=5 // pred_check_branch
        %268 = sbr.rel (%p265) target = $region12
      $region11: #{tpu_custom_call.1} parent=5 // pred_region
        %s269 = ssub.s32 %s22, 1
        // Predicated region
        $region13: #{tpu_custom_call.1} parent=11 // pred_check
          %p270 = pneg %p55
        $region14: #{tpu_custom_call.1} parent=11 // pred_check_branch
          %272 = sbr.rel (%p270) target = $region16
        $region15: #{tpu_custom_call.1} parent=11 // pred_region
          _
        $region16: #{tpu_custom_call.1} parent=11 // pred_fallthru
          _
        // Predicated region
        $region17: #{tpu_custom_call.1} parent=11 // pred_check
          %p273 = pneg %p76
        $region18: #{tpu_custom_call.1} parent=11 // pred_check_branch
          %275 = sbr.rel (%p273) target = $region20
        $region19: #{tpu_custom_call.1} parent=11 // pred_region
          _
        $region20: #{tpu_custom_call.1} parent=11 // pred_fallthru
          _
        // Predicated region
        $region21: #{tpu_custom_call.1} parent=11 // pred_check
          %p276 = pneg %p97
        $region22: #{tpu_custom_call.1} parent=11 // pred_check_branch
          %278 = sbr.rel (%p276) target = $region24
        $region23: #{tpu_custom_call.1} parent=11 // pred_region
          _
        $region24: #{tpu_custom_call.1} parent=11 // pred_fallthru
          _
      $region12: #{tpu_custom_call.1} parent=5 // pred_fallthru
        _
      %p279 = scmp.lt.s32.totalorder %s22, 4
      // Predicated region
      $region25: #{tpu_custom_call.1} parent=5 // pred_check
        %p280 = pneg %p279
      $region26: #{tpu_custom_call.1} parent=5 // pred_check_branch
        %282 = sbr.rel (%p280) target = $region28
      $region27: #{tpu_custom_call.1} parent=5 // pred_region
        // Predicated region
        $region29: #{tpu_custom_call.1} parent=27 // pred_check
          %p283 = pneg %p117
        $region30: #{tpu_custom_call.1} parent=27 // pred_check_branch
          %285 = sbr.rel (%p283) target = $region32
        $region31: #{tpu_custom_call.1} parent=27 // pred_region
          %s286 = smul.u32 16, %s29
          %p287 = scmp.lt.s32.totalorder %s286, 31
          %s288 = scalar_select %p287, %s286, 31
          %s289 = smul.addr %s288, 8
          %s290 = scalar_lea.vmem %s4, %s289
          %s291 = smul.u32 16, %s29
        $region32: #{tpu_custom_call.1} parent=27 // pred_fallthru
          _
        // Predicated region
        $region33: #{tpu_custom_call.1} parent=27 // pred_check
          %p292 = pneg %p143
        $region34: #{tpu_custom_call.1} parent=27 // pred_check_branch
          %294 = sbr.rel (%p292) target = $region36
        $region35: #{tpu_custom_call.1} parent=27 // pred_region
          %s295 = smul.u32 16, %s30
          %p296 = scmp.lt.s32.totalorder %s295, 31
          %s297 = scalar_select %p296, %s295, 31
          %s298 = smul.addr %s297, 8
          %s299 = scalar_lea.vmem %s5, %s298
          %s300 = smul.u32 16, %s30
        $region36: #{tpu_custom_call.1} parent=27 // pred_fallthru
          _
        // Predicated region
        $region37: #{tpu_custom_call.1} parent=27 // pred_check
          %p301 = pneg %p169
        $region38: #{tpu_custom_call.1} parent=27 // pred_check_branch
          %303 = sbr.rel (%p301) target = $region40
        $region39: #{tpu_custom_call.1} parent=27 // pred_region
          %s304 = smul.u32 16, %s29
          %p305 = scmp.lt.s32.totalorder %s304, 31
          %s306 = scalar_select %p305, %s304, 31
          %s307 = smul.addr %s306, 8
          %s308 = scalar_lea.vmem %s6, %s307
          %s309 = smul.u32 16, %s29
        $region40: #{tpu_custom_call.1} parent=27 // pred_fallthru
          _
        // Predicated region
        $region41: #{tpu_custom_call.1} parent=27 // pred_check
          %p310 = pneg %p195
        $region42: #{tpu_custom_call.1} parent=27 // pred_check_branch
          %312 = sbr.rel (%p310) target = $region44
        $region43: #{tpu_custom_call.1} parent=27 // pred_region
          %s313 = smul.u32 16, %s30
          %p314 = scmp.lt.s32.totalorder %s313, 31
          %s315 = scalar_select %p314, %s313, 31
          %s316 = smul.addr %s315, 8
          %s317 = scalar_lea.vmem %s7, %s316
          %s318 = smul.u32 16, %s30
        $region44: #{tpu_custom_call.1} parent=27 // pred_fallthru
          _
        // Predicated region
        $region45: #{tpu_custom_call.1} parent=27 // pred_check
          %p319 = pneg %p223
        $region46: #{tpu_custom_call.1} parent=27 // pred_check_branch
          %321 = sbr.rel (%p319) target = $region48
        $region47: #{tpu_custom_call.1} parent=27 // pred_region
          %s322 = sand.u32 %s213, 1
          %s323 = sand.u32 %s213, 1
          %s324 = smul.addr %s323, 64
          %s325 = scalar_lea.vmem [#allocation7], %s324
          %s326 = smul.u32 16, %s29
          %s327 = smul.addr %s326, 2
          %s328 = sadd.s32 %s30, %s327
          %s329 = smul.addr %s328, 4
          %s330 = scalar_lea.vmem %s8, %s329
          // Predicated region
          $region49: #{tpu_custom_call.1} parent=47 // pred_check
            _
          $region50: #{tpu_custom_call.1} parent=47 // pred_check_branch
            %332 = sbr.rel (0) target = $region52
          $region51: #{tpu_custom_call.1} parent=47 // pred_region
            // Predicated region
            $region53: #{tpu_custom_call.1} parent=51 // pred_check
              _
            $region54: #{tpu_custom_call.1} parent=51 // pred_check_branch
              %334 = sbr.rel target = $region56
            $region55: #{tpu_custom_call.1} parent=51 // pred_region
              // Predicated region
              $region68: #{tpu_custom_call.1} parent=55 // pred_check
                _
              $region69: #{tpu_custom_call.1} parent=55 // pred_check_branch
                %379 = sbr.rel (0) target = $region71
              $region70: #{tpu_custom_call.1} parent=55 // pred_region
                loop: start=0, step=1, limit=1
                $region72: #{tpu_custom_call.1} parent=70 // loop_pre_header
                  _
                $region73: #{tpu_custom_call.1} parent=70 // loop_header
                  %s381 = sphi 0, %s385
                  %p382 = scmp.ge.s32.totalorder %s381, 1
                  %s386 = sphi %s330, %s330
                  %s387 = sphi %s325, %s325
                $region74: #{tpu_custom_call.1} parent=70 // loop_header_branch
                  %384 = sbr.rel (%p382) target = $region78
                $region75: #{tpu_custom_call.1} parent=70 // loop_body
                  _
                $region76: #{tpu_custom_call.1} parent=70 // loop_footer
                  %s385 = sadd.s32 1, %s381
                $region77: #{tpu_custom_call.1} parent=70 // loop_footer_branch
                  %380 = sbr.rel target = $region73
                $region78: #{tpu_custom_call.1} parent=70 // loop_exit
                  _
                loop: start=0, step=1, limit=1
                $region79: #{tpu_custom_call.1} parent=70 // loop_pre_header
                  _
                $region80: #{tpu_custom_call.1} parent=70 // loop_header
                  %s390 = sphi 0, %s394
                  %p391 = scmp.ge.s32.totalorder %s390, 1
                  %s395 = sphi %s330, %s330
                  %s396 = sphi %s325, %s325
                $region81: #{tpu_custom_call.1} parent=70 // loop_header_branch
                  %393 = sbr.rel (%p391) target = $region85
                $region82: #{tpu_custom_call.1} parent=70 // loop_body
                  %v397 = vld [vmem:[%s395] sm:$0xf]
                  %398 = vst [vmem:[%s396] sm:$0xf] %v397
                  %v399 = vld [vmem:[%s395 + $0x8] sm:$0xf]
                  %400 = vst [vmem:[%s396 + $0x4] sm:$0xf] %v399
                  %v401 = vld [vmem:[%s395 + $0x10] sm:$0xf]
                  %402 = vst [vmem:[%s396 + $0x8] sm:$0xf] %v401
                  %v403 = vld [vmem:[%s395 + $0x18] sm:$0xf]
                  %404 = vst [vmem:[%s396 + $0xc] sm:$0xf] %v403
                  %v405 = vld [vmem:[%s395 + $0x20] sm:$0xf]
                  %406 = vst [vmem:[%s396 + $0x10] sm:$0xf] %v405
                  %v407 = vld [vmem:[%s395 + $0x28] sm:$0xf]
                  %408 = vst [vmem:[%s396 + $0x14] sm:$0xf] %v407
                  %v409 = vld [vmem:[%s395 + $0x30] sm:$0xf]
                  %410 = vst [vmem:[%s396 + $0x18] sm:$0xf] %v409
                  %v411 = vld [vmem:[%s395 + $0x38] sm:$0xf]
                  %412 = vst [vmem:[%s396 + $0x1c] sm:$0xf] %v411
                  %v413 = vld [vmem:[%s395 + $0x40] sm:$0xf]
                  %414 = vst [vmem:[%s396 + $0x20] sm:$0xf] %v413
                  %v415 = vld [vmem:[%s395 + $0x48] sm:$0xf]
                  %416 = vst [vmem:[%s396 + $0x24] sm:$0xf] %v415
                  %v417 = vld [vmem:[%s395 + $0x50] sm:$0xf]
                  %418 = vst [vmem:[%s396 + $0x28] sm:$0xf] %v417
                  %v419 = vld [vmem:[%s395 + $0x58] sm:$0xf]
                  %420 = vst [vmem:[%s396 + $0x2c] sm:$0xf] %v419
                  %v421 = vld [vmem:[%s395 + $0x60] sm:$0xf]
                  %422 = vst [vmem:[%s396 + $0x30] sm:$0xf] %v421
                  %v423 = vld [vmem:[%s395 + $0x68] sm:$0xf]
                  %424 = vst [vmem:[%s396 + $0x34] sm:$0xf] %v423
                  %v425 = vld [vmem:[%s395 + $0x70] sm:$0xf]
                  %426 = vst [vmem:[%s396 + $0x38] sm:$0xf] %v425
                  %v427 = vld [vmem:[%s395 + $0x78] sm:$0xf]
                  %428 = vst [vmem:[%s396 + $0x3c] sm:$0xf] %v427
                $region83: #{tpu_custom_call.1} parent=70 // loop_footer
                  %s394 = sadd.s32 1, %s390
                $region84: #{tpu_custom_call.1} parent=70 // loop_footer_branch
                  %389 = sbr.rel target = $region80
                $region85: #{tpu_custom_call.1} parent=70 // loop_exit
                  _
              $region71: #{tpu_custom_call.1} parent=55 // pred_fallthru
                _
            $region56: #{tpu_custom_call.1} parent=51 // pred_fallthru
              _
            // Predicated region
            $region57: #{tpu_custom_call.1} parent=51 // pred_check
              _
            $region58: #{tpu_custom_call.1} parent=51 // pred_check_branch
              %336 = sbr.rel (0) target = $region60
            $region59: #{tpu_custom_call.1} parent=51 // pred_region
              loop: start=0, step=1, limit=1
              $region61: #{tpu_custom_call.1} parent=59 // loop_pre_header
                _
              $region62: #{tpu_custom_call.1} parent=59 // loop_header
                %s339 = sphi 0, %s343
                %p340 = scmp.ge.s32.totalorder %s339, 1
                %s344 = sphi %s330, %s330
                %s345 = sphi %s325, %s325
              $region63: #{tpu_custom_call.1} parent=59 // loop_header_branch
                %342 = sbr.rel (%p340) target = $region67
              $region64: #{tpu_custom_call.1} parent=59 // loop_body
                %v346 = vld [vmem:[%s344] sm:$0xf]
                %347 = vst [vmem:[%s345] sm:$0xf] %v346
                %v348 = vld [vmem:[%s344 + $0x8] sm:$0xf]
                %349 = vst [vmem:[%s345 + $0x4] sm:$0xf] %v348
                %v350 = vld [vmem:[%s344 + $0x10] sm:$0xf]
                %351 = vst [vmem:[%s345 + $0x8] sm:$0xf] %v350
                %v352 = vld [vmem:[%s344 + $0x18] sm:$0xf]
                %353 = vst [vmem:[%s345 + $0xc] sm:$0xf] %v352
                %v354 = vld [vmem:[%s344 + $0x20] sm:$0xf]
                %355 = vst [vmem:[%s345 + $0x10] sm:$0xf] %v354
                %v356 = vld [vmem:[%s344 + $0x28] sm:$0xf]
                %357 = vst [vmem:[%s345 + $0x14] sm:$0xf] %v356
                %v358 = vld [vmem:[%s344 + $0x30] sm:$0xf]
                %359 = vst [vmem:[%s345 + $0x18] sm:$0xf] %v358
                %v360 = vld [vmem:[%s344 + $0x38] sm:$0xf]
                %361 = vst [vmem:[%s345 + $0x1c] sm:$0xf] %v360
                %v362 = vld [vmem:[%s344 + $0x40] sm:$0xf]
                %363 = vst [vmem:[%s345 + $0x20] sm:$0xf] %v362
                %v364 = vld [vmem:[%s344 + $0x48] sm:$0xf]
                %365 = vst [vmem:[%s345 + $0x24] sm:$0xf] %v364
                %v366 = vld [vmem:[%s344 + $0x50] sm:$0xf]
                %367 = vst [vmem:[%s345 + $0x28] sm:$0xf] %v366
                %v368 = vld [vmem:[%s344 + $0x58] sm:$0xf]
                %369 = vst [vmem:[%s345 + $0x2c] sm:$0xf] %v368
                %v370 = vld [vmem:[%s344 + $0x60] sm:$0xf]
                %371 = vst [vmem:[%s345 + $0x30] sm:$0xf] %v370
                %v372 = vld [vmem:[%s344 + $0x68] sm:$0xf]
                %373 = vst [vmem:[%s345 + $0x34] sm:$0xf] %v372
                %v374 = vld [vmem:[%s344 + $0x70] sm:$0xf]
                %375 = vst [vmem:[%s345 + $0x38] sm:$0xf] %v374
                %v376 = vld [vmem:[%s344 + $0x78] sm:$0xf]
                %377 = vst [vmem:[%s345 + $0x3c] sm:$0xf] %v376
              $region65: #{tpu_custom_call.1} parent=59 // loop_footer
                %s343 = sadd.s32 1, %s339
              $region66: #{tpu_custom_call.1} parent=59 // loop_footer_branch
                %338 = sbr.rel target = $region62
              $region67: #{tpu_custom_call.1} parent=59 // loop_exit
                _
            $region60: #{tpu_custom_call.1} parent=51 // pred_fallthru
              _
          $region52: #{tpu_custom_call.1} parent=47 // pred_fallthru
            _
          %429 = vnop
        $region48: #{tpu_custom_call.1} parent=27 // pred_fallthru
          _
      $region28: #{tpu_custom_call.1} parent=5 // pred_fallthru
        _
      %p430 = scmp.le.s32.totalorder 1, %s22
      %p431 = scmp.lt.s32.totalorder %s22, 5
      %p432 = pnand %p430, %p431
      %p433 = pneg %p432
      // Predicated region
      $region86: #{tpu_custom_call.1} parent=5 // pred_check
        _
      $region87: #{tpu_custom_call.1} parent=5 // pred_check_branch
        %435 = sbr.rel (%p432) target = $region89
      $region88: #{tpu_custom_call.1} parent=5 // pred_region
        %s436 = ssub.s32 %s22, 1
        %s437 = sand.u32 %s216, 1
        %s438 = sand.u32 %s216, 1
        %s439 = smul.addr %s438, 64
        %s440 = scalar_lea.vmem [#allocation7], %s439
        // Predicated region
        $region90: #{tpu_custom_call.1} parent=88 // pred_check
          %p441 = pneg %p229
        $region91: #{tpu_custom_call.1} parent=88 // pred_check_branch
          %443 = sbr.rel (%p441) target = $region93
        $region92: #{tpu_custom_call.1} parent=88 // pred_region
          _
        $region93: #{tpu_custom_call.1} parent=88 // pred_fallthru
          _
        %p444 = pneg %p55
        %p445 = pneg %p52
        %p446 = pneg %p76
        %p447 = pneg %p73
        %p448 = pneg %p97
        %p449 = pneg %p94
        %s450 = smul.u32 16, %s31
        %p451 = scmp.lt.s32.totalorder %s450, 31
        %s452 = scalar_select %p451, %s450, 31
        %s453 = smul.addr %s452, 8
        %s454 = scalar_lea.vmem %s4, %s453
        %p455 = pneg %p123
        %p456 = pneg %p120
        %s457 = smul.u32 16, %s32
        %p458 = scmp.lt.s32.totalorder %s457, 31
        %s459 = scalar_select %p458, %s457, 31
        %s460 = smul.addr %s459, 8
        %s461 = scalar_lea.vmem %s5, %s460
        %p462 = pneg %p149
        %p463 = pneg %p146
        %s464 = smul.u32 16, %s31
        %p465 = scmp.lt.s32.totalorder %s464, 31
        %s466 = scalar_select %p465, %s464, 31
        %s467 = smul.addr %s466, 8
        %s468 = scalar_lea.vmem %s6, %s467
        %p469 = pneg %p175
        %p470 = pneg %p172
        %s471 = smul.u32 16, %s32
        %p472 = scmp.lt.s32.totalorder %s471, 31
        %s473 = scalar_select %p472, %s471, 31
        %s474 = smul.addr %s473, 8
        %s475 = scalar_lea.vmem %s7, %s474
        %p476 = pneg %p201
        %p477 = pneg %p198
        %s478 = sand.u32 %s216, 1
        %s479 = sand.u32 %s216, 1
        %s480 = smul.addr %s479, 64
        %s481 = scalar_lea.vmem [#allocation7], %s480
        %p482 = pneg %p229
        %p483 = pneg %p226
        %p484 = pneg %p255
        %p485 = pneg %p252
        %s486 = smul.u32 16, %s31
        %p487 = scmp.lt.s32.totalorder %s486, 31
        %s488 = scalar_select %p487, %s486, 31
        %s489 = smul.addr %s488, 8
        %s490 = scalar_lea.vmem %s9, %s489
        %s491 = smul.u32 16, %s31
        %p492 = scmp.lt.s32.totalorder %s491, 31
        %s493 = scalar_select %p492, %s491, 31
        %s494 = smul.addr %s493, 8
        %s495 = scalar_lea.vmem %s4, %s494
        %s496 = smul.u32 16, %s31
        %s497 = smul.u32 16, %s32
        %p498 = scmp.lt.s32.totalorder %s497, 31
        %s499 = scalar_select %p498, %s497, 31
        %s500 = smul.addr %s499, 8
        %s501 = scalar_lea.vmem %s5, %s500
        %s502 = smul.u32 16, %s32
        %s503 = smul.u32 16, %s31
        %p504 = scmp.lt.s32.totalorder %s503, 31
        %s505 = scalar_select %p504, %s503, 31
        %s506 = smul.addr %s505, 8
        %s507 = scalar_lea.vmem %s6, %s506
        %s508 = smul.u32 16, %s31
        %s509 = smul.u32 16, %s32
        %p510 = scmp.lt.s32.totalorder %s509, 31
        %s511 = scalar_select %p510, %s509, 31
        %s512 = smul.addr %s511, 8
        %s513 = scalar_lea.vmem %s7, %s512
        %s514 = smul.u32 16, %s32
        %s515 = smul.u32 16, %s31
        %s516 = smul.u32 16, %s31
        %p517 = scmp.lt.s32.totalorder %s516, 31
        %s518 = scalar_select %p517, %s516, 31
        %s519 = smul.addr %s518, 8
        %s520 = scalar_lea.vmem %s9, %s519
        %s521 = smul.u32 16, %s31
        %p522 = scmp.eq.s32.totalorder %s32, 0
        // Predicated region
        $region94: #{tpu_custom_call.1} parent=88 // pred_check
          %p523 = pneg %p522
        $region95: #{tpu_custom_call.1} parent=88 // pred_check_branch
          %525 = sbr.rel (%p523) target = $region97
        $region96: #{tpu_custom_call.1} parent=88 // pred_region
          %vm526 = vcmask 130048
          %527 = vst.msk [vmem:[#allocation2] sm:$0xff] %vm526, 0.0
          %528 = vst.msk [vmem:[#allocation2 + $0x8] sm:$0xff] %vm526, 0.0
          %529 = vst.msk [vmem:[#allocation2 + $0x10] sm:$0xff] %vm526, 0.0
          %530 = vst.msk [vmem:[#allocation2 + $0x18] sm:$0xff] %vm526, 0.0
          %531 = vst.msk [vmem:[#allocation2 + $0x20] sm:$0xff] %vm526, 0.0
          %532 = vst.msk [vmem:[#allocation2 + $0x28] sm:$0xff] %vm526, 0.0
          %533 = vst.msk [vmem:[#allocation2 + $0x30] sm:$0xff] %vm526, 0.0
          %534 = vst.msk [vmem:[#allocation2 + $0x38] sm:$0xff] %vm526, 0.0
          %535 = vst.msk [vmem:[#allocation2 + $0x40] sm:$0xff] %vm526, 0.0
          %536 = vst.msk [vmem:[#allocation2 + $0x48] sm:$0xff] %vm526, 0.0
          %537 = vst.msk [vmem:[#allocation2 + $0x50] sm:$0xff] %vm526, 0.0
          %538 = vst.msk [vmem:[#allocation2 + $0x58] sm:$0xff] %vm526, 0.0
          %539 = vst.msk [vmem:[#allocation2 + $0x60] sm:$0xff] %vm526, 0.0
          %540 = vst.msk [vmem:[#allocation2 + $0x68] sm:$0xff] %vm526, 0.0
          %541 = vst.msk [vmem:[#allocation2 + $0x70] sm:$0xff] %vm526, 0.0
          %542 = vst.msk [vmem:[#allocation2 + $0x78] sm:$0xff] %vm526, 0.0
          %v543 = vld [vmem:[%s495] sm:$0xff]
          %v544 = vld [vmem:[%s495 + $0x8] sm:$0xff]
          %v545 = vld [vmem:[%s495 + $0x10] sm:$0xff]
          %v546 = vld [vmem:[%s495 + $0x18] sm:$0xff]
          %v547 = vld [vmem:[%s495 + $0x20] sm:$0xff]
          %v548 = vld [vmem:[%s495 + $0x28] sm:$0xff]
          %v549 = vld [vmem:[%s495 + $0x30] sm:$0xff]
          %v550 = vld [vmem:[%s495 + $0x38] sm:$0xff]
          %v551 = vld [vmem:[%s495 + $0x40] sm:$0xff]
          %v552 = vld [vmem:[%s495 + $0x48] sm:$0xff]
          %v553 = vld [vmem:[%s495 + $0x50] sm:$0xff]
          %v554 = vld [vmem:[%s495 + $0x58] sm:$0xff]
          %v555 = vld [vmem:[%s495 + $0x60] sm:$0xff]
          %v556 = vld [vmem:[%s495 + $0x68] sm:$0xff]
          %v557 = vld [vmem:[%s495 + $0x70] sm:$0xff]
          %v558 = vld [vmem:[%s495 + $0x78] sm:$0xff]
          %v559 = vld [vmem:[%s1] sm:$0x1]
          %v561 = vlaneseq
          %v562 = vshrl.u32 %v561, 7
          %v563 = vsub.s32 0, %v562
          %v564 = vrot.slane %v559, %v563
          %v566 = vmul.f32 %v543, %v564
          %v567 = vmul.f32 %v544, %v564
          %v568 = vmul.f32 %v545, %v564
          %v569 = vmul.f32 %v546, %v564
          %v570 = vmul.f32 %v547, %v564
          %v571 = vmul.f32 %v548, %v564
          %v572 = vmul.f32 %v549, %v564
          %v573 = vmul.f32 %v550, %v564
          %v574 = vmul.f32 %v551, %v564
          %v575 = vmul.f32 %v552, %v564
          %v576 = vmul.f32 %v553, %v564
          %v577 = vmul.f32 %v554, %v564
          %v578 = vmul.f32 %v555, %v564
          %v579 = vmul.f32 %v556, %v564
          %v580 = vmul.f32 %v557, %v564
          %v581 = vmul.f32 %v558, %v564
          %v582 = vsel %vm526, %v566, 0.0
          %583 = vadd.xlane.f32.xlu0 %v582
          %v584 = vpop.xlane.xlu0 %583
          %v585 = vsel %vm526, %v567, 0.0
          %586 = vadd.xlane.f32.xlu0 %v585
          %v587 = vpop.xlane.xlu0 %586
          %v588 = vsel %vm526, %v568, 0.0
          %589 = vadd.xlane.f32.xlu0 %v588
          %v590 = vpop.xlane.xlu0 %589
          %v591 = vsel %vm526, %v569, 0.0
          %592 = vadd.xlane.f32.xlu0 %v591
          %v593 = vpop.xlane.xlu0 %592
          %v594 = vsel %vm526, %v570, 0.0
          %595 = vadd.xlane.f32.xlu0 %v594
          %v596 = vpop.xlane.xlu0 %595
          %v597 = vsel %vm526, %v571, 0.0
          %598 = vadd.xlane.f32.xlu0 %v597
          %v599 = vpop.xlane.xlu0 %598
          %v600 = vsel %vm526, %v572, 0.0
          %601 = vadd.xlane.f32.xlu0 %v600
          %v602 = vpop.xlane.xlu0 %601
          %v603 = vsel %vm526, %v573, 0.0
          %604 = vadd.xlane.f32.xlu0 %v603
          %v605 = vpop.xlane.xlu0 %604
          %v606 = vsel %vm526, %v574, 0.0
          %607 = vadd.xlane.f32.xlu0 %v606
          %v608 = vpop.xlane.xlu0 %607
          %v609 = vsel %vm526, %v575, 0.0
          %610 = vadd.xlane.f32.xlu0 %v609
          %v611 = vpop.xlane.xlu0 %610
          %v612 = vsel %vm526, %v576, 0.0
          %613 = vadd.xlane.f32.xlu0 %v612
          %v614 = vpop.xlane.xlu0 %613
          %v615 = vsel %vm526, %v577, 0.0
          %616 = vadd.xlane.f32.xlu0 %v615
          %v617 = vpop.xlane.xlu0 %616
          %v618 = vsel %vm526, %v578, 0.0
          %619 = vadd.xlane.f32.xlu0 %v618
          %v620 = vpop.xlane.xlu0 %619
          %v621 = vsel %vm526, %v579, 0.0
          %622 = vadd.xlane.f32.xlu0 %v621
          %v623 = vpop.xlane.xlu0 %622
          %v624 = vsel %vm526, %v580, 0.0
          %625 = vadd.xlane.f32.xlu0 %v624
          %v626 = vpop.xlane.xlu0 %625
          %v627 = vsel %vm526, %v581, 0.0
          %628 = vadd.xlane.f32.xlu0 %v627
          %v629 = vpop.xlane.xlu0 %628
          %s630 = sld [smem:[#allocation6]]
          %v631 = vstv %s630
          %v632 = vadd.f32 %v584, %v631
          %v633 = vadd.f32 %v587, %v631
          %v634 = vadd.f32 %v590, %v631
          %v635 = vadd.f32 %v593, %v631
          %v636 = vadd.f32 %v596, %v631
          %v637 = vadd.f32 %v599, %v631
          %v638 = vadd.f32 %v602, %v631
          %v639 = vadd.f32 %v605, %v631
          %v640 = vadd.f32 %v608, %v631
          %v641 = vadd.f32 %v611, %v631
          %v642 = vadd.f32 %v614, %v631
          %v643 = vadd.f32 %v617, %v631
          %v644 = vadd.f32 %v620, %v631
          %v645 = vadd.f32 %v623, %v631
          %v646 = vadd.f32 %v626, %v631
          %v647 = vadd.f32 %v629, %v631
          %vm648 = vcmask 7168
          %649 = vst.msk [vmem:[#allocation3] sm:$0xff] %vm648, %v632
          %650 = vst.msk [vmem:[#allocation3 + $0x8] sm:$0xff] %vm648, %v633
          %651 = vst.msk [vmem:[#allocation3 + $0x10] sm:$0xff] %vm648, %v634
          %652 = vst.msk [vmem:[#allocation3 + $0x18] sm:$0xff] %vm648, %v635
          %653 = vst.msk [vmem:[#allocation3 + $0x20] sm:$0xff] %vm648, %v636
          %654 = vst.msk [vmem:[#allocation3 + $0x28] sm:$0xff] %vm648, %v637
          %655 = vst.msk [vmem:[#allocation3 + $0x30] sm:$0xff] %vm648, %v638
          %656 = vst.msk [vmem:[#allocation3 + $0x38] sm:$0xff] %vm648, %v639
          %657 = vst.msk [vmem:[#allocation3 + $0x40] sm:$0xff] %vm648, %v640
          %658 = vst.msk [vmem:[#allocation3 + $0x48] sm:$0xff] %vm648, %v641
          %659 = vst.msk [vmem:[#allocation3 + $0x50] sm:$0xff] %vm648, %v642
          %660 = vst.msk [vmem:[#allocation3 + $0x58] sm:$0xff] %vm648, %v643
          %661 = vst.msk [vmem:[#allocation3 + $0x60] sm:$0xff] %vm648, %v644
          %662 = vst.msk [vmem:[#allocation3 + $0x68] sm:$0xff] %vm648, %v645
          %663 = vst.msk [vmem:[#allocation3 + $0x70] sm:$0xff] %vm648, %v646
          %664 = vst.msk [vmem:[#allocation3 + $0x78] sm:$0xff] %vm648, %v647
        $region97: #{tpu_custom_call.1} parent=88 // pred_fallthru
          _
        %s665 = smul.u32 %s31, 2
        %s666 = sadd.s32 %s665, %s32
        %s667 = sld [smem:[#allocation5 + %s666]]
        %p668 = scmp.gt.s32.totalorder %s667, 0
        // Predicated region
        $region98: #{tpu_custom_call.1} parent=88 // pred_check
          %p669 = pneg %p668
        $region99: #{tpu_custom_call.1} parent=88 // pred_check_branch
          %671 = sbr.rel (%p669) target = $region101
        $region100: #{tpu_custom_call.1} parent=88 // pred_region
          %v672 = vld [vmem:[%s501] sm:$0xff]
          %v673 = vld [vmem:[%s501 + $0x8] sm:$0xff]
          %v674 = vld [vmem:[%s501 + $0x10] sm:$0xff]
          %v675 = vld [vmem:[%s501 + $0x18] sm:$0xff]
          %v676 = vld [vmem:[%s501 + $0x20] sm:$0xff]
          %v677 = vld [vmem:[%s501 + $0x28] sm:$0xff]
          %v678 = vld [vmem:[%s501 + $0x30] sm:$0xff]
          %v679 = vld [vmem:[%s501 + $0x38] sm:$0xff]
          %v680 = vld [vmem:[%s501 + $0x40] sm:$0xff]
          %v681 = vld [vmem:[%s501 + $0x48] sm:$0xff]
          %v682 = vld [vmem:[%s501 + $0x50] sm:$0xff]
          %v683 = vld [vmem:[%s501 + $0x58] sm:$0xff]
          %v684 = vld [vmem:[%s501 + $0x60] sm:$0xff]
          %v685 = vld [vmem:[%s501 + $0x68] sm:$0xff]
          %v686 = vld [vmem:[%s501 + $0x70] sm:$0xff]
          %v687 = vld [vmem:[%s501 + $0x78] sm:$0xff]
          %v688 = vld [vmem:[%s2] sm:$0x1]
          %vm689 = vcmask 130048
          %v691 = vsel %vm689, %v688, 0
          %v694 = vsel %vm689, %v672, 0
          %v697 = vsel %vm689, %v673, 0
          %v700 = vsel %vm689, %v674, 0
          %v703 = vsel %vm689, %v675, 0
          %v706 = vsel %vm689, %v676, 0
          %v709 = vsel %vm689, %v677, 0
          %v712 = vsel %vm689, %v678, 0
          %v715 = vsel %vm689, %v679, 0
          %v718 = vsel %vm689, %v680, 0
          %v721 = vsel %vm689, %v681, 0
          %v724 = vsel %vm689, %v682, 0
          %v727 = vsel %vm689, %v683, 0
          %v730 = vsel %vm689, %v684, 0
          %v733 = vsel %vm689, %v685, 0
          %v736 = vsel %vm689, %v686, 0
          %v739 = vsel %vm689, %v687, 0
          %741 = vmatprep.subr.mxu0 0.0
          %742 = vmatpush1.xpose.msra.mxu0 %v694
          %743 = vmatprep.subr.mxu0 0.0
          %744 = vmatpush1.xpose.msra.mxu0 %v697
          %745 = vmatprep.subr.mxu0 0.0
          %746 = vmatpush1.xpose.msra.mxu0 %v700
          %747 = vmatprep.subr.mxu0 0.0
          %748 = vmatpush1.xpose.msra.mxu0 %v703
          %749 = vmatprep.subr.mxu0 0.0
          %750 = vmatpush1.xpose.msra.mxu0 %v706
          %751 = vmatprep.subr.mxu0 0.0
          %752 = vmatpush1.xpose.msra.mxu0 %v709
          %753 = vmatprep.subr.mxu0 0.0
          %754 = vmatpush1.xpose.msra.mxu0 %v712
          %755 = vmatprep.subr.mxu0 0.0
          %756 = vmatpush1.xpose.msra.mxu0 %v715
          %757 = vmatprep.subr.mxu0 0.0
          %758 = vmatpush1.xpose.msra.mxu0 %v718
          %759 = vmatprep.subr.mxu0 0.0
          %760 = vmatpush1.xpose.msra.mxu0 %v721
          %761 = vmatprep.subr.mxu0 0.0
          %762 = vmatpush1.xpose.msra.mxu0 %v724
          %763 = vmatprep.subr.mxu0 0.0
          %764 = vmatpush1.xpose.msra.mxu0 %v727
          %765 = vmatprep.subr.mxu0 0.0
          %766 = vmatpush1.xpose.msra.mxu0 %v730
          %767 = vmatprep.subr.mxu0 0.0
          %768 = vmatpush1.xpose.msra.mxu0 %v733
          %769 = vmatprep.subr.mxu0 0.0
          %770 = vmatpush1.xpose.msra.mxu0 %v736
          %771 = vmatprep.subr.mxu0 0.0
          %772 = vmatpush1.xpose.msra.mxu0 %v739
          %773 = vmatprep.subr.mxu0 0.0
          %774 = vmatpush1.xpose.msra.mxu0 0.0
          %775 = vmatprep.subr.mxu0 0.0
          %776 = vmatpush1.xpose.msra.mxu0 0.0
          %777 = vmatprep.subr.mxu0 0.0
          %778 = vmatpush1.xpose.msra.mxu0 0.0
          %779 = vmatprep.subr.mxu0 0.0
          %780 = vmatpush1.xpose.msra.mxu0 0.0
          %781 = vmatprep.subr.mxu0 0.0
          %782 = vmatpush1.xpose.msra.mxu0 0.0
          %783 = vmatprep.subr.mxu0 0.0
          %784 = vmatpush1.xpose.msra.mxu0 0.0
          %785 = vmatprep.subr.mxu0 0.0
          %786 = vmatpush1.xpose.msra.mxu0 0.0
          %787 = vmatprep.subr.mxu0 0.0
          %788 = vmatpush1.xpose.msra.mxu0 0.0
          %789 = vmatprep.subr.mxu0 0.0
          %790 = vmatpush1.xpose.msra.mxu0 0.0
          %791 = vmatprep.subr.mxu0 0.0
          %792 = vmatpush1.xpose.msra.mxu0 0.0
          %793 = vmatprep.subr.mxu0 0.0
          %794 = vmatpush1.xpose.msra.mxu0 0.0
          %795 = vmatprep.subr.mxu0 0.0
          %796 = vmatpush1.xpose.msra.mxu0 0.0
          %797 = vmatprep.subr.mxu0 0.0
          %798 = vmatpush1.xpose.msra.mxu0 0.0
          %799 = vmatprep.subr.mxu0 0.0
          %800 = vmatpush1.xpose.msra.mxu0 0.0
          %801 = vmatprep.subr.mxu0 0.0
          %802 = vmatpush1.xpose.msra.mxu0 0.0
          %803 = vmatprep.subr.mxu0 0.0
          %804 = vmatpush1.xpose.msra.mxu0 0.0
          %805 = vmatprep.mubr.f32.mxu0 0.0
          %806 = vmatmul.mubr.f32.gmra.mrb[0].mxu0 %v691
          %v807 = vpop.f32.mrb[0].mxu0
          %v808 = vadd.f32 0.0, %v807
          %v809 = vpop.f32.mrb[0].mxu0
          %810 = vdwg.mxu0
          %v811 = vld [vmem:[#allocation3] sm:$0xff]
          %v812 = vld [vmem:[#allocation3 + $0x8] sm:$0xff]
          %v813 = vld [vmem:[#allocation3 + $0x10] sm:$0xff]
          %v814 = vld [vmem:[#allocation3 + $0x18] sm:$0xff]
          %v815 = vld [vmem:[#allocation3 + $0x20] sm:$0xff]
          %v816 = vld [vmem:[#allocation3 + $0x28] sm:$0xff]
          %v817 = vld [vmem:[#allocation3 + $0x30] sm:$0xff]
          %v818 = vld [vmem:[#allocation3 + $0x38] sm:$0xff]
          %v819 = vld [vmem:[#allocation3 + $0x40] sm:$0xff]
          %v820 = vld [vmem:[#allocation3 + $0x48] sm:$0xff]
          %v821 = vld [vmem:[#allocation3 + $0x50] sm:$0xff]
          %v822 = vld [vmem:[#allocation3 + $0x58] sm:$0xff]
          %v823 = vld [vmem:[#allocation3 + $0x60] sm:$0xff]
          %v824 = vld [vmem:[#allocation3 + $0x68] sm:$0xff]
          %v825 = vld [vmem:[#allocation3 + $0x70] sm:$0xff]
          %v826 = vld [vmem:[#allocation3 + $0x78] sm:$0xff]
          %828 = vset.pattern.permute.xlu0 0
          %829 = vperm.xlu0 %828, %v811
          %v830 = vpop.permute.xlu0 %829
          %833 = vset.pattern.permute.xlu0 0
          %834 = vperm.xlu0 %833, %v812
          %v835 = vpop.permute.xlu0 %834
          %838 = vset.pattern.permute.xlu0 0
          %839 = vperm.xlu0 %838, %v813
          %v840 = vpop.permute.xlu0 %839
          %843 = vset.pattern.permute.xlu0 0
          %844 = vperm.xlu0 %843, %v814
          %v845 = vpop.permute.xlu0 %844
          %848 = vset.pattern.permute.xlu0 0
          %849 = vperm.xlu0 %848, %v815
          %v850 = vpop.permute.xlu0 %849
          %853 = vset.pattern.permute.xlu0 0
          %854 = vperm.xlu0 %853, %v816
          %v855 = vpop.permute.xlu0 %854
          %858 = vset.pattern.permute.xlu0 0
          %859 = vperm.xlu0 %858, %v817
          %v860 = vpop.permute.xlu0 %859
          %863 = vset.pattern.permute.xlu0 0
          %864 = vperm.xlu0 %863, %v818
          %v865 = vpop.permute.xlu0 %864
          %868 = vset.pattern.permute.xlu0 0
          %869 = vperm.xlu0 %868, %v819
          %v870 = vpop.permute.xlu0 %869
          %873 = vset.pattern.permute.xlu0 0
          %874 = vperm.xlu0 %873, %v820
          %v875 = vpop.permute.xlu0 %874
          %878 = vset.pattern.permute.xlu0 0
          %879 = vperm.xlu0 %878, %v821
          %v880 = vpop.permute.xlu0 %879
          %883 = vset.pattern.permute.xlu0 0
          %884 = vperm.xlu0 %883, %v822
          %v885 = vpop.permute.xlu0 %884
          %888 = vset.pattern.permute.xlu0 0
          %889 = vperm.xlu0 %888, %v823
          %v890 = vpop.permute.xlu0 %889
          %893 = vset.pattern.permute.xlu0 0
          %894 = vperm.xlu0 %893, %v824
          %v895 = vpop.permute.xlu0 %894
          %898 = vset.pattern.permute.xlu0 0
          %899 = vperm.xlu0 %898, %v825
          %v900 = vpop.permute.xlu0 %899
          %903 = vset.pattern.permute.xlu0 0
          %904 = vperm.xlu0 %903, %v826
          %v905 = vpop.permute.xlu0 %904
          %v907 = vlaneseq
          %v908 = vshrl.u32 %v907, 7
          %v909 = vsub.s32 0, %v908
          %v910 = vrot.slane %v808, %v909
          %v911 = vadd.f32 %v830, %v910
          %v912 = vadd.f32 %v835, %v910
          %v913 = vadd.f32 %v840, %v910
          %v914 = vadd.f32 %v845, %v910
          %v915 = vadd.f32 %v850, %v910
          %v916 = vadd.f32 %v855, %v910
          %v917 = vadd.f32 %v860, %v910
          %v918 = vadd.f32 %v865, %v910
          %v919 = vadd.f32 %v870, %v910
          %v920 = vadd.f32 %v875, %v910
          %v921 = vadd.f32 %v880, %v910
          %v922 = vadd.f32 %v885, %v910
          %v923 = vadd.f32 %v890, %v910
          %v924 = vadd.f32 %v895, %v910
          %v925 = vadd.f32 %v900, %v910
          %v926 = vadd.f32 %v905, %v910
          %v927 = vtanh.pop %v911
          %v928 = vtanh.pop %v912
          %v929 = vtanh.pop %v913
          %v930 = vtanh.pop %v914
          %v931 = vtanh.pop %v915
          %v932 = vtanh.pop %v916
          %v933 = vtanh.pop %v917
          %v934 = vtanh.pop %v918
          %v935 = vtanh.pop %v919
          %v936 = vtanh.pop %v920
          %v937 = vtanh.pop %v921
          %v938 = vtanh.pop %v922
          %v939 = vtanh.pop %v923
          %v940 = vtanh.pop %v924
          %v941 = vtanh.pop %v925
          %v942 = vtanh.pop %v926
          %v943 = vld [vmem:[%s440] sm:$0xf]
          %v944 = vld [vmem:[%s440 + $0x4] sm:$0xf]
          %v945 = vld [vmem:[%s440 + $0x8] sm:$0xf]
          %v946 = vld [vmem:[%s440 + $0xc] sm:$0xf]
          %v947 = vld [vmem:[%s440 + $0x10] sm:$0xf]
          %v948 = vld [vmem:[%s440 + $0x14] sm:$0xf]
          %v949 = vld [vmem:[%s440 + $0x18] sm:$0xf]
          %v950 = vld [vmem:[%s440 + $0x1c] sm:$0xf]
          %v951 = vld [vmem:[%s440 + $0x20] sm:$0xf]
          %v952 = vld [vmem:[%s440 + $0x24] sm:$0xf]
          %v953 = vld [vmem:[%s440 + $0x28] sm:$0xf]
          %v954 = vld [vmem:[%s440 + $0x2c] sm:$0xf]
          %v955 = vld [vmem:[%s440 + $0x30] sm:$0xf]
          %v956 = vld [vmem:[%s440 + $0x34] sm:$0xf]
          %v957 = vld [vmem:[%s440 + $0x38] sm:$0xf]
          %v958 = vld [vmem:[%s440 + $0x3c] sm:$0xf]
          %v959 = vunpack.c.l.bf16 %v943
          %v960 = vunpack.c.l.bf16 %v944
          %v961 = vunpack.c.l.bf16 %v945
          %v962 = vunpack.c.l.bf16 %v946
          %v963 = vunpack.c.l.bf16 %v947
          %v964 = vunpack.c.l.bf16 %v948
          %v965 = vunpack.c.l.bf16 %v949
          %v966 = vunpack.c.l.bf16 %v950
          %v967 = vunpack.c.l.bf16 %v951
          %v968 = vunpack.c.l.bf16 %v952
          %v969 = vunpack.c.l.bf16 %v953
          %v970 = vunpack.c.l.bf16 %v954
          %v971 = vunpack.c.l.bf16 %v955
          %v972 = vunpack.c.l.bf16 %v956
          %v973 = vunpack.c.l.bf16 %v957
          %v974 = vunpack.c.l.bf16 %v958
          %v975 = vmul.f32 %v927, %v959
          %v976 = vmul.f32 %v928, %v960
          %v977 = vmul.f32 %v929, %v961
          %v978 = vmul.f32 %v930, %v962
          %v979 = vmul.f32 %v931, %v963
          %v980 = vmul.f32 %v932, %v964
          %v981 = vmul.f32 %v933, %v965
          %v982 = vmul.f32 %v934, %v966
          %v983 = vmul.f32 %v935, %v967
          %v984 = vmul.f32 %v936, %v968
          %v985 = vmul.f32 %v937, %v969
          %v986 = vmul.f32 %v938, %v970
          %v987 = vmul.f32 %v939, %v971
          %v988 = vmul.f32 %v940, %v972
          %v989 = vmul.f32 %v941, %v973
          %v990 = vmul.f32 %v942, %v974
          %v991 = vld [vmem:[%s513] sm:$0xff]
          %v992 = vld [vmem:[%s513 + $0x8] sm:$0xff]
          %v993 = vld [vmem:[%s513 + $0x10] sm:$0xff]
          %v994 = vld [vmem:[%s513 + $0x18] sm:$0xff]
          %v995 = vld [vmem:[%s513 + $0x20] sm:$0xff]
          %v996 = vld [vmem:[%s513 + $0x28] sm:$0xff]
          %v997 = vld [vmem:[%s513 + $0x30] sm:$0xff]
          %v998 = vld [vmem:[%s513 + $0x38] sm:$0xff]
          %v999 = vld [vmem:[%s513 + $0x40] sm:$0xff]
          %v1000 = vld [vmem:[%s513 + $0x48] sm:$0xff]
          %v1001 = vld [vmem:[%s513 + $0x50] sm:$0xff]
          %v1002 = vld [vmem:[%s513 + $0x58] sm:$0xff]
          %v1003 = vld [vmem:[%s513 + $0x60] sm:$0xff]
          %v1004 = vld [vmem:[%s513 + $0x68] sm:$0xff]
          %v1005 = vld [vmem:[%s513 + $0x70] sm:$0xff]
          %v1006 = vld [vmem:[%s513 + $0x78] sm:$0xff]
          %1008 = vset.pattern.permute.xlu0 0
          %1009 = vperm.xlu0 %1008, %v991
          %v1010 = vpop.permute.xlu0 %1009
          %1013 = vset.pattern.permute.xlu0 0
          %1014 = vperm.xlu0 %1013, %v992
          %v1015 = vpop.permute.xlu0 %1014
          %1018 = vset.pattern.permute.xlu0 0
          %1019 = vperm.xlu0 %1018, %v993
          %v1020 = vpop.permute.xlu0 %1019
          %1023 = vset.pattern.permute.xlu0 0
          %1024 = vperm.xlu0 %1023, %v994
          %v1025 = vpop.permute.xlu0 %1024
          %1028 = vset.pattern.permute.xlu0 0
          %1029 = vperm.xlu0 %1028, %v995
          %v1030 = vpop.permute.xlu0 %1029
          %1033 = vset.pattern.permute.xlu0 0
          %1034 = vperm.xlu0 %1033, %v996
          %v1035 = vpop.permute.xlu0 %1034
          %1038 = vset.pattern.permute.xlu0 0
          %1039 = vperm.xlu0 %1038, %v997
          %v1040 = vpop.permute.xlu0 %1039
          %1043 = vset.pattern.permute.xlu0 0
          %1044 = vperm.xlu0 %1043, %v998
          %v1045 = vpop.permute.xlu0 %1044
          %1048 = vset.pattern.permute.xlu0 0
          %1049 = vperm.xlu0 %1048, %v999
          %v1050 = vpop.permute.xlu0 %1049
          %1053 = vset.pattern.permute.xlu0 0
          %1054 = vperm.xlu0 %1053, %v1000
          %v1055 = vpop.permute.xlu0 %1054
          %1058 = vset.pattern.permute.xlu0 0
          %1059 = vperm.xlu0 %1058, %v1001
          %v1060 = vpop.permute.xlu0 %1059
          %1063 = vset.pattern.permute.xlu0 0
          %1064 = vperm.xlu0 %1063, %v1002
          %v1065 = vpop.permute.xlu0 %1064
          %1068 = vset.pattern.permute.xlu0 0
          %1069 = vperm.xlu0 %1068, %v1003
          %v1070 = vpop.permute.xlu0 %1069
          %1073 = vset.pattern.permute.xlu0 0
          %1074 = vperm.xlu0 %1073, %v1004
          %v1075 = vpop.permute.xlu0 %1074
          %1078 = vset.pattern.permute.xlu0 0
          %1079 = vperm.xlu0 %1078, %v1005
          %v1080 = vpop.permute.xlu0 %1079
          %1083 = vset.pattern.permute.xlu0 0
          %1084 = vperm.xlu0 %1083, %v1006
          %v1085 = vpop.permute.xlu0 %1084
          %v1087 = vmul.f32 %v672, %v1010
          %v1088 = vmul.f32 %v673, %v1015
          %v1089 = vmul.f32 %v674, %v1020
          %v1090 = vmul.f32 %v675, %v1025
          %v1091 = vmul.f32 %v676, %v1030
          %v1092 = vmul.f32 %v677, %v1035
          %v1093 = vmul.f32 %v678, %v1040
          %v1094 = vmul.f32 %v679, %v1045
          %v1095 = vmul.f32 %v680, %v1050
          %v1096 = vmul.f32 %v681, %v1055
          %v1097 = vmul.f32 %v682, %v1060
          %v1098 = vmul.f32 %v683, %v1065
          %v1099 = vmul.f32 %v684, %v1070
          %v1100 = vmul.f32 %v685, %v1075
          %v1101 = vmul.f32 %v686, %v1080
          %v1102 = vmul.f32 %v687, %v1085
          %v1103 = vld [vmem:[#allocation2] sm:$0xff]
          %v1104 = vld [vmem:[#allocation2 + $0x8] sm:$0xff]
          %v1105 = vld [vmem:[#allocation2 + $0x10] sm:$0xff]
          %v1106 = vld [vmem:[#allocation2 + $0x18] sm:$0xff]
          %v1107 = vld [vmem:[#allocation2 + $0x20] sm:$0xff]
          %v1108 = vld [vmem:[#allocation2 + $0x28] sm:$0xff]
          %v1109 = vld [vmem:[#allocation2 + $0x30] sm:$0xff]
          %v1110 = vld [vmem:[#allocation2 + $0x38] sm:$0xff]
          %v1111 = vld [vmem:[#allocation2 + $0x40] sm:$0xff]
          %v1112 = vld [vmem:[#allocation2 + $0x48] sm:$0xff]
          %v1113 = vld [vmem:[#allocation2 + $0x50] sm:$0xff]
          %v1114 = vld [vmem:[#allocation2 + $0x58] sm:$0xff]
          %v1115 = vld [vmem:[#allocation2 + $0x60] sm:$0xff]
          %v1116 = vld [vmem:[#allocation2 + $0x68] sm:$0xff]
          %v1117 = vld [vmem:[#allocation2 + $0x70] sm:$0xff]
          %v1118 = vld [vmem:[#allocation2 + $0x78] sm:$0xff]
          %1119 = vmatprep.subr.mxu0 0.0
          %1120 = vmatpush1.msra.mxu0 %v1087
          %1121 = vmatprep.subr.mxu0 0.0
          %1122 = vmatpush1.msra.mxu0 %v1088
          %1123 = vmatprep.subr.mxu0 0.0
          %1124 = vmatpush1.msra.mxu0 %v1089
          %1125 = vmatprep.subr.mxu0 0.0
          %1126 = vmatpush1.msra.mxu0 %v1090
          %1127 = vmatprep.subr.mxu0 0.0
          %1128 = vmatpush1.msra.mxu0 %v1091
          %1129 = vmatprep.subr.mxu0 0.0
          %1130 = vmatpush1.msra.mxu0 %v1092
          %1131 = vmatprep.subr.mxu0 0.0
          %1132 = vmatpush1.msra.mxu0 %v1093
          %1133 = vmatprep.subr.mxu0 0.0
          %1134 = vmatpush1.msra.mxu0 %v1094
          %1135 = vmatprep.subr.mxu0 0.0
          %1136 = vmatpush1.msra.mxu0 %v1095
          %1137 = vmatprep.subr.mxu0 0.0
          %1138 = vmatpush1.msra.mxu0 %v1096
          %1139 = vmatprep.subr.mxu0 0.0
          %1140 = vmatpush1.msra.mxu0 %v1097
          %1141 = vmatprep.subr.mxu0 0.0
          %1142 = vmatpush1.msra.mxu0 %v1098
          %1143 = vmatprep.subr.mxu0 0.0
          %1144 = vmatpush1.msra.mxu0 %v1099
          %1145 = vmatprep.subr.mxu0 0.0
          %1146 = vmatpush1.msra.mxu0 %v1100
          %1147 = vmatprep.subr.mxu0 0.0
          %1148 = vmatpush1.msra.mxu0 %v1101
          %1149 = vmatprep.subr.mxu0 0.0
          %1150 = vmatpush1.msra.mxu0 %v1102
          %1151 = vmatprep.subr.mxu0 0.0
          %1152 = vmatpush1.msra.mxu0 0.0
          %1153 = vmatprep.subr.mxu0 0.0
          %1154 = vmatpush1.msra.mxu0 0.0
          %1155 = vmatprep.subr.mxu0 0.0
          %1156 = vmatpush1.msra.mxu0 0.0
          %1157 = vmatprep.subr.mxu0 0.0
          %1158 = vmatpush1.msra.mxu0 0.0
          %1159 = vmatprep.subr.mxu0 0.0
          %1160 = vmatpush1.msra.mxu0 0.0
          %1161 = vmatprep.subr.mxu0 0.0
          %1162 = vmatpush1.msra.mxu0 0.0
          %1163 = vmatprep.subr.mxu0 0.0
          %1164 = vmatpush1.msra.mxu0 0.0
          %1165 = vmatprep.subr.mxu0 0.0
          %1166 = vmatpush1.msra.mxu0 0.0
          %1167 = vmatprep.subr.mxu0 0.0
          %1168 = vmatpush1.msra.mxu0 0.0
          %1169 = vmatprep.subr.mxu0 0.0
          %1170 = vmatpush1.msra.mxu0 0.0
          %1171 = vmatprep.subr.mxu0 0.0
          %1172 = vmatpush1.msra.mxu0 0.0
          %1173 = vmatprep.subr.mxu0 0.0
          %1174 = vmatpush1.msra.mxu0 0.0
          %1175 = vmatprep.subr.mxu0 0.0
          %1176 = vmatpush1.msra.mxu0 0.0
          %1177 = vmatprep.subr.mxu0 0.0
          %1178 = vmatpush1.msra.mxu0 0.0
          %1179 = vmatprep.subr.mxu0 0.0
          %1180 = vmatpush1.msra.mxu0 0.0
          %1181 = vmatprep.subr.mxu0 0.0
          %1182 = vmatpush1.msra.mxu0 0.0
          %1183 = vmatprep.mubr.f32.mxu0 0.0
          %1184 = vmatmul.mubr.f32.gmra.mrb[0].mxu0 %v975
          %v1185 = vpop.f32.mrb[0].mxu0
          %v1186 = vadd.f32 0.0, %v1185
          %v1187 = vpop.f32.mrb[0].mxu0
          %1188 = vmatprep.mubr.f32.mxu0 0.0
          %1189 = vmatmul.mubr.f32.gmra.mrb[0].mxu0 %v976
          %v1190 = vpop.f32.mrb[0].mxu0
          %v1191 = vadd.f32 0.0, %v1190
          %v1192 = vpop.f32.mrb[0].mxu0
          %1193 = vmatprep.mubr.f32.mxu0 0.0
          %1194 = vmatmul.mubr.f32.gmra.mrb[0].mxu0 %v977
          %v1195 = vpop.f32.mrb[0].mxu0
          %v1196 = vadd.f32 0.0, %v1195
          %v1197 = vpop.f32.mrb[0].mxu0
          %1198 = vmatprep.mubr.f32.mxu0 0.0
          %1199 = vmatmul.mubr.f32.gmra.mrb[0].mxu0 %v978
          %v1200 = vpop.f32.mrb[0].mxu0
          %v1201 = vadd.f32 0.0, %v1200
          %v1202 = vpop.f32.mrb[0].mxu0
          %1203 = vmatprep.mubr.f32.mxu0 0.0
          %1204 = vmatmul.mubr.f32.gmra.mrb[0].mxu0 %v979
          %v1205 = vpop.f32.mrb[0].mxu0
          %v1206 = vadd.f32 0.0, %v1205
          %v1207 = vpop.f32.mrb[0].mxu0
          %1208 = vmatprep.mubr.f32.mxu0 0.0
          %1209 = vmatmul.mubr.f32.gmra.mrb[0].mxu0 %v980
          %v1210 = vpop.f32.mrb[0].mxu0
          %v1211 = vadd.f32 0.0, %v1210
          %v1212 = vpop.f32.mrb[0].mxu0
          %1213 = vmatprep.mubr.f32.mxu0 0.0
          %1214 = vmatmul.mubr.f32.gmra.mrb[0].mxu0 %v981
          %v1215 = vpop.f32.mrb[0].mxu0
          %v1216 = vadd.f32 0.0, %v1215
          %v1217 = vpop.f32.mrb[0].mxu0
          %1218 = vmatprep.mubr.f32.mxu0 0.0
          %1219 = vmatmul.mubr.f32.gmra.mrb[0].mxu0 %v982
          %v1220 = vpop.f32.mrb[0].mxu0
          %v1221 = vadd.f32 0.0, %v1220
          %v1222 = vpop.f32.mrb[0].mxu0
          %1223 = vmatprep.mubr.f32.mxu0 0.0
          %1224 = vmatmul.mubr.f32.gmra.mrb[0].mxu0 %v983
          %v1225 = vpop.f32.mrb[0].mxu0
          %v1226 = vadd.f32 0.0, %v1225
          %v1227 = vpop.f32.mrb[0].mxu0
          %1228 = vmatprep.mubr.f32.mxu0 0.0
          %1229 = vmatmul.mubr.f32.gmra.mrb[0].mxu0 %v984
          %v1230 = vpop.f32.mrb[0].mxu0
          %v1231 = vadd.f32 0.0, %v1230
          %v1232 = vpop.f32.mrb[0].mxu0
          %1233 = vmatprep.mubr.f32.mxu0 0.0
          %1234 = vmatmul.mubr.f32.gmra.mrb[0].mxu0 %v985
          %v1235 = vpop.f32.mrb[0].mxu0
          %v1236 = vadd.f32 0.0, %v1235
          %v1237 = vpop.f32.mrb[0].mxu0
          %1238 = vmatprep.mubr.f32.mxu0 0.0
          %1239 = vmatmul.mubr.f32.gmra.mrb[0].mxu0 %v986
          %v1240 = vpop.f32.mrb[0].mxu0
          %v1241 = vadd.f32 0.0, %v1240
          %v1242 = vpop.f32.mrb[0].mxu0
          %1243 = vmatprep.mubr.f32.mxu0 0.0
          %1244 = vmatmul.mubr.f32.gmra.mrb[0].mxu0 %v987
          %v1245 = vpop.f32.mrb[0].mxu0
          %v1246 = vadd.f32 0.0, %v1245
          %v1247 = vpop.f32.mrb[0].mxu0
          %1248 = vmatprep.mubr.f32.mxu0 0.0
          %1249 = vmatmul.mubr.f32.gmra.mrb[0].mxu0 %v988
          %v1250 = vpop.f32.mrb[0].mxu0
          %v1251 = vadd.f32 0.0, %v1250
          %v1252 = vpop.f32.mrb[0].mxu0
          %1253 = vmatprep.mubr.f32.mxu0 0.0
          %1254 = vmatmul.mubr.f32.gmra.mrb[0].mxu0 %v989
          %v1255 = vpop.f32.mrb[0].mxu0
          %v1256 = vadd.f32 0.0, %v1255
          %v1257 = vpop.f32.mrb[0].mxu0
          %1258 = vmatprep.mubr.f32.mxu0 0.0
          %1259 = vmatmul.mubr.f32.gmra.mrb[0].mxu0 %v990
          %v1260 = vpop.f32.mrb[0].mxu0
          %v1261 = vadd.f32 0.0, %v1260
          %v1262 = vpop.f32.mrb[0].mxu0
          %1263 = vdwg.mxu0
          %v1264 = vadd.f32 %v1103, %v1186
          %v1265 = vadd.f32 %v1104, %v1191
          %v1266 = vadd.f32 %v1105, %v1196
          %v1267 = vadd.f32 %v1106, %v1201
          %v1268 = vadd.f32 %v1107, %v1206
          %v1269 = vadd.f32 %v1108, %v1211
          %v1270 = vadd.f32 %v1109, %v1216
          %v1271 = vadd.f32 %v1110, %v1221
          %v1272 = vadd.f32 %v1111, %v1226
          %v1273 = vadd.f32 %v1112, %v1231
          %v1274 = vadd.f32 %v1113, %v1236
          %v1275 = vadd.f32 %v1114, %v1241
          %v1276 = vadd.f32 %v1115, %v1246
          %v1277 = vadd.f32 %v1116, %v1251
          %v1278 = vadd.f32 %v1117, %v1256
          %v1279 = vadd.f32 %v1118, %v1261
          %1280 = vst.msk [vmem:[#allocation2] sm:$0xff] %vm689, %v1264
          %1281 = vst.msk [vmem:[#allocation2 + $0x8] sm:$0xff] %vm689, %v1265
          %1282 = vst.msk [vmem:[#allocation2 + $0x10] sm:$0xff] %vm689, %v1266
          %1283 = vst.msk [vmem:[#allocation2 + $0x18] sm:$0xff] %vm689, %v1267
          %1284 = vst.msk [vmem:[#allocation2 + $0x20] sm:$0xff] %vm689, %v1268
          %1285 = vst.msk [vmem:[#allocation2 + $0x28] sm:$0xff] %vm689, %v1269
          %1286 = vst.msk [vmem:[#allocation2 + $0x30] sm:$0xff] %vm689, %v1270
          %1287 = vst.msk [vmem:[#allocation2 + $0x38] sm:$0xff] %vm689, %v1271
          %1288 = vst.msk [vmem:[#allocation2 + $0x40] sm:$0xff] %vm689, %v1272
          %1289 = vst.msk [vmem:[#allocation2 + $0x48] sm:$0xff] %vm689, %v1273
          %1290 = vst.msk [vmem:[#allocation2 + $0x50] sm:$0xff] %vm689, %v1274
          %1291 = vst.msk [vmem:[#allocation2 + $0x58] sm:$0xff] %vm689, %v1275
          %1292 = vst.msk [vmem:[#allocation2 + $0x60] sm:$0xff] %vm689, %v1276
          %1293 = vst.msk [vmem:[#allocation2 + $0x68] sm:$0xff] %vm689, %v1277
          %1294 = vst.msk [vmem:[#allocation2 + $0x70] sm:$0xff] %vm689, %v1278
          %1295 = vst.msk [vmem:[#allocation2 + $0x78] sm:$0xff] %vm689, %v1279
        $region101: #{tpu_custom_call.1} parent=88 // pred_fallthru
          _
        %p1296 = scmp.eq.s32.totalorder %s32, 1
        // Predicated region
        $region102: #{tpu_custom_call.1} parent=88 // pred_check
          %p1297 = pneg %p1296
        $region103: #{tpu_custom_call.1} parent=88 // pred_check_branch
          %1299 = sbr.rel (%p1297) target = $region105
        $region104: #{tpu_custom_call.1} parent=88 // pred_region
          %v1300 = vld [vmem:[%s507] sm:$0xff]
          %v1301 = vld [vmem:[%s507 + $0x8] sm:$0xff]
          %v1302 = vld [vmem:[%s507 + $0x10] sm:$0xff]
          %v1303 = vld [vmem:[%s507 + $0x18] sm:$0xff]
          %v1304 = vld [vmem:[%s507 + $0x20] sm:$0xff]
          %v1305 = vld [vmem:[%s507 + $0x28] sm:$0xff]
          %v1306 = vld [vmem:[%s507 + $0x30] sm:$0xff]
          %v1307 = vld [vmem:[%s507 + $0x38] sm:$0xff]
          %v1308 = vld [vmem:[%s507 + $0x40] sm:$0xff]
          %v1309 = vld [vmem:[%s507 + $0x48] sm:$0xff]
          %v1310 = vld [vmem:[%s507 + $0x50] sm:$0xff]
          %v1311 = vld [vmem:[%s507 + $0x58] sm:$0xff]
          %v1312 = vld [vmem:[%s507 + $0x60] sm:$0xff]
          %v1313 = vld [vmem:[%s507 + $0x68] sm:$0xff]
          %v1314 = vld [vmem:[%s507 + $0x70] sm:$0xff]
          %v1315 = vld [vmem:[%s507 + $0x78] sm:$0xff]
          %v1316 = vld [vmem:[#allocation2] sm:$0xff]
          %v1317 = vld [vmem:[#allocation2 + $0x8] sm:$0xff]
          %v1318 = vld [vmem:[#allocation2 + $0x10] sm:$0xff]
          %v1319 = vld [vmem:[#allocation2 + $0x18] sm:$0xff]
          %v1320 = vld [vmem:[#allocation2 + $0x20] sm:$0xff]
          %v1321 = vld [vmem:[#allocation2 + $0x28] sm:$0xff]
          %v1322 = vld [vmem:[#allocation2 + $0x30] sm:$0xff]
          %v1323 = vld [vmem:[#allocation2 + $0x38] sm:$0xff]
          %v1324 = vld [vmem:[#allocation2 + $0x40] sm:$0xff]
          %v1325 = vld [vmem:[#allocation2 + $0x48] sm:$0xff]
          %v1326 = vld [vmem:[#allocation2 + $0x50] sm:$0xff]
          %v1327 = vld [vmem:[#allocation2 + $0x58] sm:$0xff]
          %v1328 = vld [vmem:[#allocation2 + $0x60] sm:$0xff]
          %v1329 = vld [vmem:[#allocation2 + $0x68] sm:$0xff]
          %v1330 = vld [vmem:[#allocation2 + $0x70] sm:$0xff]
          %v1331 = vld [vmem:[#allocation2 + $0x78] sm:$0xff]
          %1333 = vset.pattern.permute.xlu0 0
          %1334 = vperm.xlu0 %1333, %v1300
          %v1335 = vpop.permute.xlu0 %1334
          %1338 = vset.pattern.permute.xlu0 0
          %1339 = vperm.xlu0 %1338, %v1301
          %v1340 = vpop.permute.xlu0 %1339
          %1343 = vset.pattern.permute.xlu0 0
          %1344 = vperm.xlu0 %1343, %v1302
          %v1345 = vpop.permute.xlu0 %1344
          %1348 = vset.pattern.permute.xlu0 0
          %1349 = vperm.xlu0 %1348, %v1303
          %v1350 = vpop.permute.xlu0 %1349
          %1353 = vset.pattern.permute.xlu0 0
          %1354 = vperm.xlu0 %1353, %v1304
          %v1355 = vpop.permute.xlu0 %1354
          %1358 = vset.pattern.permute.xlu0 0
          %1359 = vperm.xlu0 %1358, %v1305
          %v1360 = vpop.permute.xlu0 %1359
          %1363 = vset.pattern.permute.xlu0 0
          %1364 = vperm.xlu0 %1363, %v1306
          %v1365 = vpop.permute.xlu0 %1364
          %1368 = vset.pattern.permute.xlu0 0
          %1369 = vperm.xlu0 %1368, %v1307
          %v1370 = vpop.permute.xlu0 %1369
          %1373 = vset.pattern.permute.xlu0 0
          %1374 = vperm.xlu0 %1373, %v1308
          %v1375 = vpop.permute.xlu0 %1374
          %1378 = vset.pattern.permute.xlu0 0
          %1379 = vperm.xlu0 %1378, %v1309
          %v1380 = vpop.permute.xlu0 %1379
          %1383 = vset.pattern.permute.xlu0 0
          %1384 = vperm.xlu0 %1383, %v1310
          %v1385 = vpop.permute.xlu0 %1384
          %1388 = vset.pattern.permute.xlu0 0
          %1389 = vperm.xlu0 %1388, %v1311
          %v1390 = vpop.permute.xlu0 %1389
          %1393 = vset.pattern.permute.xlu0 0
          %1394 = vperm.xlu0 %1393, %v1312
          %v1395 = vpop.permute.xlu0 %1394
          %1398 = vset.pattern.permute.xlu0 0
          %1399 = vperm.xlu0 %1398, %v1313
          %v1400 = vpop.permute.xlu0 %1399
          %1403 = vset.pattern.permute.xlu0 0
          %1404 = vperm.xlu0 %1403, %v1314
          %v1405 = vpop.permute.xlu0 %1404
          %1408 = vset.pattern.permute.xlu0 0
          %1409 = vperm.xlu0 %1408, %v1315
          %v1410 = vpop.permute.xlu0 %1409
          %v1412 = vmul.f32 %v1335, %v1316
          %v1413 = vmul.f32 %v1340, %v1317
          %v1414 = vmul.f32 %v1345, %v1318
          %v1415 = vmul.f32 %v1350, %v1319
          %v1416 = vmul.f32 %v1355, %v1320
          %v1417 = vmul.f32 %v1360, %v1321
          %v1418 = vmul.f32 %v1365, %v1322
          %v1419 = vmul.f32 %v1370, %v1323
          %v1420 = vmul.f32 %v1375, %v1324
          %v1421 = vmul.f32 %v1380, %v1325
          %v1422 = vmul.f32 %v1385, %v1326
          %v1423 = vmul.f32 %v1390, %v1327
          %v1424 = vmul.f32 %v1395, %v1328
          %v1425 = vmul.f32 %v1400, %v1329
          %v1426 = vmul.f32 %v1405, %v1330
          %v1427 = vmul.f32 %v1410, %v1331
          %vm1428 = vcmask 130048
          %1429 = vst.msk [vmem:[%s520] sm:$0xff] %vm1428, %v1412
          %1430 = vst.msk [vmem:[%s520 + $0x8] sm:$0xff] %vm1428, %v1413
          %1431 = vst.msk [vmem:[%s520 + $0x10] sm:$0xff] %vm1428, %v1414
          %1432 = vst.msk [vmem:[%s520 + $0x18] sm:$0xff] %vm1428, %v1415
          %1433 = vst.msk [vmem:[%s520 + $0x20] sm:$0xff] %vm1428, %v1416
          %1434 = vst.msk [vmem:[%s520 + $0x28] sm:$0xff] %vm1428, %v1417
          %1435 = vst.msk [vmem:[%s520 + $0x30] sm:$0xff] %vm1428, %v1418
          %1436 = vst.msk [vmem:[%s520 + $0x38] sm:$0xff] %vm1428, %v1419
          %1437 = vst.msk [vmem:[%s520 + $0x40] sm:$0xff] %vm1428, %v1420
          %1438 = vst.msk [vmem:[%s520 + $0x48] sm:$0xff] %vm1428, %v1421
          %1439 = vst.msk [vmem:[%s520 + $0x50] sm:$0xff] %vm1428, %v1422
          %1440 = vst.msk [vmem:[%s520 + $0x58] sm:$0xff] %vm1428, %v1423
          %1441 = vst.msk [vmem:[%s520 + $0x60] sm:$0xff] %vm1428, %v1424
          %1442 = vst.msk [vmem:[%s520 + $0x68] sm:$0xff] %vm1428, %v1425
          %1443 = vst.msk [vmem:[%s520 + $0x70] sm:$0xff] %vm1428, %v1426
          %1444 = vst.msk [vmem:[%s520 + $0x78] sm:$0xff] %vm1428, %v1427
        $region105: #{tpu_custom_call.1} parent=88 // pred_fallthru
          _
        %s1445 = smul.u32 16, %s31
        %p1446 = scmp.lt.s32.totalorder %s1445, 31
        %s1447 = scalar_select %p1446, %s1445, 31
        %s1448 = smul.addr %s1447, 8
        %s1449 = scalar_lea.vmem %s9, %s1448
        // Predicated region
        $region106: #{tpu_custom_call.1} parent=88 // pred_check
          %p1450 = pneg %p252
        $region107: #{tpu_custom_call.1} parent=88 // pred_check_branch
          %1452 = sbr.rel (%p1450) target = $region109
        $region108: #{tpu_custom_call.1} parent=88 // pred_region
          %s1453 = smul.u32 16, %s31
        $region109: #{tpu_custom_call.1} parent=88 // pred_fallthru
          _
      $region89: #{tpu_custom_call.1} parent=5 // pred_fallthru
        _
      %p1454 = scmp.le.s32.totalorder 2, %s22
      // Predicated region
      $region110: #{tpu_custom_call.1} parent=5 // pred_check
        %p1455 = pneg %p1454
      $region111: #{tpu_custom_call.1} parent=5 // pred_check_branch
        %1457 = sbr.rel (%p1455) target = $region113
      $region112: #{tpu_custom_call.1} parent=5 // pred_region
        %s1458 = ssub.s32 %s22, 2
        // Predicated region
        $region114: #{tpu_custom_call.1} parent=112 // pred_check
          %p1459 = pneg %p258
        $region115: #{tpu_custom_call.1} parent=112 // pred_check_branch
          %1461 = sbr.rel (%p1459) target = $region117
        $region116: #{tpu_custom_call.1} parent=112 // pred_region
          %s1462 = smul.u32 16, %s33
          %p1463 = scmp.lt.s32.totalorder %s1462, 31
          %s1464 = scalar_select %p1463, %s1462, 31
          %s1465 = smul.addr %s1464, 8
          %s1466 = scalar_lea.vmem %s9, %s1465
        $region117: #{tpu_custom_call.1} parent=112 // pred_fallthru
          _
      $region113: #{tpu_custom_call.1} parent=5 // pred_fallthru
        _
    $region6: #{tpu_custom_call.1} parent=1 // loop_footer
      %s26 = sadd.s32 1, %s22
    $region7: #{tpu_custom_call.1} parent=1 // loop_footer_branch
      %21 = sbr.rel target = $region3
    $region8: #{tpu_custom_call.1} parent=1 // loop_exit
      _

</llo_original>
